<compile_context>
chip_gen: v7x
topology: tpu7x:2x2x1
jax: 0.10.0
libtpu: 0.0.40
codegen_flags: <defaults>
</compile_context>

<pallas_src>
import functools

import jax
import jax.numpy as jnp
from jax.experimental import pallas as pl
from jax.experimental.pallas import tpu as pltpu


LN_EPS = 1e-5      # nn.LayerNorm default
LANE = 128
SUBLANE = 8


def _round_up(n, m):
    return (n + m - 1) // m * m


def _dnn_kernel(n_hidden, inv_hidden, compute_dtype, *refs):
    """Fused forward pass for one batch tile.

    refs = (x_ref, [w_i, b_i] * n_hidden, w_out_t, b_out_t, o_ref)

    Hidden feature dims are zero-padded to 128 lanes; padded weight columns and
    bias lanes are zero, so the pre-LN activation's padded lanes are exactly
    zero and the LN lane-sums (divided by the *real* hidden width) stay exact.
    gamma/beta were folded into the next layer's weight/bias offline, so LN here
    is just (acc - mu) * rstd. The final Linear is computed as an NT matmul
    ('ok,bk->ob') so the output store is a tiny lane-dense [out_sub, tb] block.
    """
    x_ref = refs[0]
    o_ref = refs[-1]
    p = refs[1:-1]

    h = x_ref[...].astype(compute_dtype)
    for i in range(n_hidden):
        w_ref, b_ref = p[2 * i], p[2 * i + 1]
        # Linear: bf16 operands on the MXU, f32 accumulate; bias + ReLU in f32.
        acc = jnp.dot(h, w_ref[...], preferred_element_type=jnp.float32)
        acc = jnp.maximum(acc + b_ref[...], 0.0)
        # LayerNorm (gamma/beta pre-folded): one-pass sums, EUP rsqrt.
        s1 = jnp.sum(acc, axis=-1, keepdims=True)
        s2 = jnp.sum(acc * acc, axis=-1, keepdims=True)
        mu = s1 * inv_hidden[i]
        var = jnp.maximum(s2 * inv_hidden[i] - mu * mu, 0.0)
        rstd = jax.lax.rsqrt(var + LN_EPS)
        h = ((acc - mu) * rstd).astype(compute_dtype)   # bf16 for the next MXU op

    w_out_ref, b_out_ref = p[-2], p[-1]
    # 'ok,bk->ob' (contract last dims of both): output lands as [out_sub, tb].
    logit = jax.lax.dot_general(
        w_out_ref[...], h, (((1,), (1,)), ((), ())),
        preferred_element_type=jnp.float32)
    o_ref[...] = (logit + b_out_ref[...]).astype(o_ref.dtype)   # lane-dense store


def init_dnn_params(key, in_dim, hidden_dims, out_dim=1, dtype=jnp.float32):
    """PyTorch-nn.Linear-like init. Weights stored as [in_features, out_features]."""
    params = []
    d_in = in_dim
    for h in hidden_dims:
        key, kw, kb = jax.random.split(key, 3)
        bound = 1.0 / float(d_in) ** 0.5
        params.append(jax.random.uniform(kw, (d_in, h), dtype, -bound, bound))
        params.append(jax.random.uniform(kb, (h,), dtype, -bound, bound))
        params.append(jnp.ones((h,), dtype))    # LayerNorm weight (gamma)
        params.append(jnp.zeros((h,), dtype))   # LayerNorm bias (beta)
        d_in = h
    key, kw, kb = jax.random.split(key, 3)
    bound = 1.0 / float(d_in) ** 0.5
    params.append(jax.random.uniform(kw, (d_in, out_dim), dtype, -bound, bound))
    params.append(jax.random.uniform(kb, (out_dim,), dtype, -bound, bound))
    return params


def _pad2(a, rows, cols):
    return jnp.pad(a, ((0, rows - a.shape[0]), (0, cols - a.shape[1])))


def _prepare_padded_params(params, in_dim, hidden_dims, out_dim, compute_dtype):
    """Fold LN gamma/beta into the next layer (in f32), then zero-pad hidden
    feature dims to 128 lanes. Weights -> compute_dtype (bf16 MXU operands),
    biases stay f32 (added in the f32 epilogue). The output layer is stored
    transposed, (out_sub, K), for the NT matmul / lane-packed output."""
    n_hidden = len(hidden_dims)
    out_sub = _round_up(max(out_dim, 1), SUBLANE)

    ws, bs, gs, bes = [], [], [], []
    for i in range(n_hidden):
        w, b, g, be = params[4 * i: 4 * i + 4]
        ws.append(jnp.asarray(w, jnp.float32))
        bs.append(jnp.asarray(b, jnp.float32))
        gs.append(jnp.asarray(g, jnp.float32))
        bes.append(jnp.asarray(be, jnp.float32))
    w_out = jnp.asarray(params[-2], jnp.float32)
    b_out = jnp.asarray(params[-1], jnp.float32)

    # LN(h) @ W + b == ((h - mu) * rstd) @ (diag(gamma) @ W) + (beta @ W + b)
    for i in range(n_hidden):
        if i + 1 < n_hidden:
            bs[i + 1] = bs[i + 1] + bes[i] @ ws[i + 1]
            ws[i + 1] = gs[i][:, None] * ws[i + 1]
        else:
            b_out = b_out + bes[i] @ w_out
            w_out = gs[i][:, None] * w_out

    padded = []
    k = in_dim                                   # first layer keeps its real K
    for i, hdim in enumerate(hidden_dims):
        h_pad = _round_up(hdim, LANE)
        padded.append(_pad2(ws[i], k, h_pad).astype(compute_dtype))
        padded.append(_pad2(bs[i].reshape(1, -1), 1, h_pad))        # f32
        k = h_pad
    padded.append(_pad2(w_out.T, out_sub, k).astype(compute_dtype))  # (out_sub, K)
    padded.append(_pad2(b_out.reshape(-1, 1), out_sub, 1))           # (out_sub, 1) f32
    return padded, out_sub


def _choose_tb(bsz, block_batch, row_bytes, fixed_bytes,
               vmem_budget=40 * 1024 * 1024):
    """Largest tile in {2048..128} that fits the VMEM budget, wastes <~10% of
    rows on batch padding, and (preferably) leaves >= 2 grid steps (v7x)."""
    cands = [t for t in (2048, 1024, 512, 256, 128)
             if t <= max(int(block_batch), LANE)
             and fixed_bytes + t * row_bytes <= vmem_budget]
    if not cands:
        cands = [LANE]

    def waste(t):
        bp = _round_up(bsz, t)
        return (bp - bsz) / bp

    for t in cands:                                  # prefer >= 2 grid steps
        if waste(t) <= 0.10 and _round_up(bsz, t) // t >= 2:
            return t
    for t in cands:
        if waste(t) <= 0.10:
            return t
    return cands[-1]


def dnn_forward(x, params, in_dim, hidden_dims, out_dim=1, *,
                block_batch=2048, compute_dtype=jnp.bfloat16):
    """inputs: [..., in_dim] (reshaped like .view(-1, in_dim)). Returns f32 [bsz, out_dim]."""
    x = x.reshape(-1, in_dim)
    bsz = x.shape[0]
    n_hidden = len(hidden_dims)

    padded_params, out_sub = _prepare_padded_params(
        params, in_dim, hidden_dims, out_dim, compute_dtype)

    # --- batch tile selection --------------------------------------------------
    param_bytes = sum(int(p.size) * p.dtype.itemsize for p in padded_params)
    max_hpad = max([_round_up(h, LANE) for h in hidden_dims], default=LANE)
    row_bytes = (2 * in_dim * x.dtype.itemsize      # x tile, double-buffered
                 + 2 * out_sub * 4                  # out tile, double-buffered
                 + 4 * max_hpad * 4)                # live f32 activation temps
    tb = _choose_tb(bsz, block_batch, row_bytes, 2 * param_bytes)
    bsz_pad = _round_up(bsz, tb)
    if bsz_pad != bsz:
        # Pad batch rows only, and only when needed (no lane padding / cast here).
        x = jnp.pad(x, ((0, bsz_pad - bsz), (0, 0)))
    grid = (bsz_pad // tb,)

    x_spec = pl.BlockSpec((tb, in_dim), lambda i: (i, 0))      # full real last dim
    out_spec = pl.BlockSpec((out_sub, tb), lambda i: (0, i))   # lane-dense, tiny rows

    inv_hidden = tuple(1.0 / float(h) for h in hidden_dims)
    kernel = functools.partial(_dnn_kernel, n_hidden, inv_hidden, compute_dtype)

    # --- cost estimate ----------------------------------------------------------
    flops = 0
    k = in_dim
    for h in hidden_dims:
        hp = _round_up(h, LANE)
        flops += 2 * bsz_pad * k * hp
        k = hp
    flops += 2 * bsz_pad * k * out_sub
    bytes_accessed = (int(x.size) * x.dtype.itemsize + param_bytes
                      + out_sub * bsz_pad * 4)

    vmem_limit = int(min(max(32 * 1024 * 1024,
                             2 * (2 * param_bytes + tb * row_bytes)),
                         48 * 1024 * 1024))          # <= 48 MiB: safe on v7x

    def build(single_buffer_params):
        if single_buffer_params:
            # Constant-index (VMEM-resident) params: no need to double-buffer.
            param_specs = [pl.BlockSpec(p.shape, lambda i: (0, 0),
                                        pipeline_mode=pl.Buffered(1))
                           for p in padded_params]
        else:
            param_specs = [pl.BlockSpec(p.shape, lambda i: (0, 0))
                           for p in padded_params]
        return pl.pallas_call(
            kernel,
            out_shape=jax.ShapeDtypeStruct((out_sub, bsz_pad), jnp.float32),
            grid=grid,
            in_specs=[x_spec] + param_specs,
            out_specs=out_spec,
            compiler_params=pltpu.CompilerParams(
                dimension_semantics=("parallel",),   # batch steps shard across TCs
                vmem_limit_bytes=vmem_limit),
            cost_estimate=pl.CostEstimate(
                flops=flops,
                transcendentals=bsz_pad * n_hidden,
                bytes_accessed=bytes_accessed),
        )

    try:
        out = build(True)(x, *padded_params)
    except Exception:
        # pipeline_mode=pl.Buffered(1) not supported by this jax build;
        # fall back to the default (double-buffered) param specs.
        out = build(False)(x, *padded_params)

    return out[:out_dim, :bsz].T


def dnn_reference(x, params, in_dim, hidden_dims, out_dim=1,
                  compute_dtype=jnp.bfloat16):
    """Pure-JAX reference mirroring the module semantics (LN with gamma/beta)
    on the kernel's dtype path (bf16 matmuls, f32 epilogue)."""
    n_hidden = len(hidden_dims)
    h = x.reshape(-1, in_dim).astype(compute_dtype)
    for i in range(n_hidden):
        w, b, g, be = params[4 * i: 4 * i + 4]
        acc = jnp.dot(h, w.astype(compute_dtype), preferred_element_type=jnp.float32)
        acc = jnp.maximum(acc + b.astype(jnp.float32), 0.0)
        mu = jnp.mean(acc, axis=-1, keepdims=True)
        var = jnp.maximum(jnp.mean(acc * acc, axis=-1, keepdims=True) - mu * mu, 0.0)
        acc = (acc - mu) * (g.astype(jnp.float32) * jax.lax.rsqrt(var + LN_EPS)) \
            + be.astype(jnp.float32)
        h = acc.astype(compute_dtype)
    w_out, b_out = params[-2], params[-1]
    return (jnp.dot(h, w_out.astype(compute_dtype), preferred_element_type=jnp.float32)
            + b_out.astype(jnp.float32))


if __name__ == "__main__":
    # Config consistent with the module: DNN(in_dim=32, hidden_dims=[32, 32],
    # out_dim=1, dropout_rate=0.0, do_batch_norm=True), batch = 8.
    in_dim = 32
    hidden_dims = [32, 32]
    out_dim = 1
    bsz = 8

    key = jax.random.PRNGKey(0)
    key, kx = jax.random.split(key)
    x = jax.random.normal(kx, (bsz, in_dim), dtype=jnp.float32)

    params = init_dnn_params(key, in_dim, hidden_dims, out_dim)

    logit = dnn_forward(x, params, in_dim, hidden_dims, out_dim)
    logit = jax.block_until_ready(logit)

    ref = dnn_reference(x, params, in_dim, hidden_dims, out_dim)
    assert logit.shape == (bsz, out_dim), logit.shape
    max_err = jnp.max(jnp.abs(logit - ref))
    assert jnp.allclose(logit, ref, atol=2e-2, rtol=2e-2), max_err

    print("KERNEL_OK")
</pallas_src>

<mosaic_0001>
module attributes {stable_mosaic.version = 11 : i64} {
  func.func @_dnn_kernel(%arg0: i32, %arg1: memref<128x32xf32, #tpu.memory_space<vmem>>, %arg2: memref<32x128xbf16, #tpu.memory_space<vmem>>, %arg3: memref<1x128xf32, #tpu.memory_space<vmem>>, %arg4: memref<128x128xbf16, #tpu.memory_space<vmem>>, %arg5: memref<1x128xf32, #tpu.memory_space<vmem>>, %arg6: memref<8x128xbf16, #tpu.memory_space<vmem>>, %arg7: memref<8x1xf32, #tpu.memory_space<vmem>>, %arg8: memref<8x128xf32, #tpu.memory_space<vmem>>) attributes {dimension_semantics = [#tpu.dimension_semantics<parallel>], iteration_bounds = array<i64: 1>, scalar_prefetch = 0 : i64, scratch_operands = 0 : i64, tpu.core_type = #tpu.core_type<tc>, window_params = [{transform_indices = @transform_0, window_bounds = array<i64: 128, 32>}, {pipeline_mode = #tpu.pipeline_mode<synchronous>, transform_indices = @transform_1, window_bounds = array<i64: 32, 128>}, {pipeline_mode = #tpu.pipeline_mode<synchronous>, transform_indices = @transform_2, window_bounds = array<i64: 1, 128>}, {pipeline_mode = #tpu.pipeline_mode<synchronous>, transform_indices = @transform_3, window_bounds = array<i64: 128, 128>}, {pipeline_mode = #tpu.pipeline_mode<synchronous>, transform_indices = @transform_4, window_bounds = array<i64: 1, 128>}, {pipeline_mode = #tpu.pipeline_mode<synchronous>, transform_indices = @transform_5, window_bounds = array<i64: 8, 128>}, {pipeline_mode = #tpu.pipeline_mode<synchronous>, transform_indices = @transform_6, window_bounds = array<i64: 8, 1>}, {transform_indices = @transform_7, window_bounds = array<i64: 8, 128>}]} {
    %c0 = arith.constant 0 : index
    %c0_0 = arith.constant 0 : index
    %0 = vector.load %arg1[%c0, %c0_0] : memref<128x32xf32, #tpu.memory_space<vmem>>, vector<128x32xf32>
    %1 = arith.truncf %0 : vector<128x32xf32> to vector<128x32xbf16>
    %c0_1 = arith.constant 0 : index
    %c0_2 = arith.constant 0 : index
    %2 = vector.load %arg2[%c0_1, %c0_2] : memref<32x128xbf16, #tpu.memory_space<vmem>>, vector<32x128xbf16>
    %cst = arith.constant dense<0.000000e+00> : vector<128x128xf32>
    %3 = tpu.matmul %1, %2, %cst {dimension_numbers = #tpu.dot_dimension_numbers<[1], [0], [0], [1], [0, 0, 1, 1], [], []>} : vector<128x32xbf16>, vector<32x128xbf16>, vector<128x128xf32> -> vector<128x128xf32>
    %c0_3 = arith.constant 0 : index
    %c0_4 = arith.constant 0 : index
    %4 = vector.load %arg3[%c0_3, %c0_4] : memref<1x128xf32, #tpu.memory_space<vmem>>, vector<1x128xf32>
    %5 = vector.broadcast %4 : vector<1x128xf32> to vector<128x128xf32>
    %6 = arith.addf %3, %5 : vector<128x128xf32>
    %cst_5 = arith.constant 0.000000e+00 : f32
    %7 = vector.broadcast %cst_5 : f32 to vector<128x128xf32>
    %8 = arith.maximumf %6, %7 : vector<128x128xf32>
    %cst_6 = arith.constant dense<0.000000e+00> : vector<128xf32>
    %9 = vector.multi_reduction <add>, %8, %cst_6 [1] : vector<128x128xf32> to vector<128xf32>
    %10 = vector.shape_cast %9 : vector<128xf32> to vector<128x1xf32>
    %11 = arith.mulf %8, %8 : vector<128x128xf32>
    %cst_7 = arith.constant dense<0.000000e+00> : vector<128xf32>
    %12 = vector.multi_reduction <add>, %11, %cst_7 [1] : vector<128x128xf32> to vector<128xf32>
    %13 = vector.shape_cast %12 : vector<128xf32> to vector<128x1xf32>
    %cst_8 = arith.constant 3.125000e-02 : f32
    %14 = vector.broadcast %cst_8 : f32 to vector<128x1xf32>
    %15 = arith.mulf %10, %14 : vector<128x1xf32>
    %cst_9 = arith.constant 3.125000e-02 : f32
    %16 = vector.broadcast %cst_9 : f32 to vector<128x1xf32>
    %17 = arith.mulf %13, %16 : vector<128x1xf32>
    %18 = arith.mulf %15, %15 : vector<128x1xf32>
    %19 = arith.subf %17, %18 : vector<128x1xf32>
    %cst_10 = arith.constant 0.000000e+00 : f32
    %20 = vector.broadcast %cst_10 : f32 to vector<128x1xf32>
    %21 = arith.maximumf %19, %20 : vector<128x1xf32>
    %cst_11 = arith.constant 9.99999974E-6 : f32
    %22 = vector.broadcast %cst_11 : f32 to vector<128x1xf32>
    %23 = arith.addf %21, %22 : vector<128x1xf32>
    %24 = math.rsqrt %23 : vector<128x1xf32>
    %25 = vector.broadcast %15 : vector<128x1xf32> to vector<128x128xf32>
    %26 = arith.subf %8, %25 : vector<128x128xf32>
    %27 = vector.broadcast %24 : vector<128x1xf32> to vector<128x128xf32>
    %28 = arith.mulf %26, %27 : vector<128x128xf32>
    %29 = arith.truncf %28 : vector<128x128xf32> to vector<128x128xbf16>
    %c0_12 = arith.constant 0 : index
    %c0_13 = arith.constant 0 : index
    %30 = vector.load %arg4[%c0_12, %c0_13] : memref<128x128xbf16, #tpu.memory_space<vmem>>, vector<128x128xbf16>
    %cst_14 = arith.constant dense<0.000000e+00> : vector<128x128xf32>
    %31 = tpu.matmul %29, %30, %cst_14 {dimension_numbers = #tpu.dot_dimension_numbers<[1], [0], [0], [1], [0, 0, 1, 1], [], []>} : vector<128x128xbf16>, vector<128x128xbf16>, vector<128x128xf32> -> vector<128x128xf32>
    %c0_15 = arith.constant 0 : index
    %c0_16 = arith.constant 0 : index
    %32 = vector.load %arg5[%c0_15, %c0_16] : memref<1x128xf32, #tpu.memory_space<vmem>>, vector<1x128xf32>
    %33 = vector.broadcast %32 : vector<1x128xf32> to vector<128x128xf32>
    %34 = arith.addf %31, %33 : vector<128x128xf32>
    %cst_17 = arith.constant 0.000000e+00 : f32
    %35 = vector.broadcast %cst_17 : f32 to vector<128x128xf32>
    %36 = arith.maximumf %34, %35 : vector<128x128xf32>
    %cst_18 = arith.constant dense<0.000000e+00> : vector<128xf32>
    %37 = vector.multi_reduction <add>, %36, %cst_18 [1] : vector<128x128xf32> to vector<128xf32>
    %38 = vector.shape_cast %37 : vector<128xf32> to vector<128x1xf32>
    %39 = arith.mulf %36, %36 : vector<128x128xf32>
    %cst_19 = arith.constant dense<0.000000e+00> : vector<128xf32>
    %40 = vector.multi_reduction <add>, %39, %cst_19 [1] : vector<128x128xf32> to vector<128xf32>
    %41 = vector.shape_cast %40 : vector<128xf32> to vector<128x1xf32>
    %cst_20 = arith.constant 3.125000e-02 : f32
    %42 = vector.broadcast %cst_20 : f32 to vector<128x1xf32>
    %43 = arith.mulf %38, %42 : vector<128x1xf32>
    %cst_21 = arith.constant 3.125000e-02 : f32
    %44 = vector.broadcast %cst_21 : f32 to vector<128x1xf32>
    %45 = arith.mulf %41, %44 : vector<128x1xf32>
    %46 = arith.mulf %43, %43 : vector<128x1xf32>
    %47 = arith.subf %45, %46 : vector<128x1xf32>
    %cst_22 = arith.constant 0.000000e+00 : f32
    %48 = vector.broadcast %cst_22 : f32 to vector<128x1xf32>
    %49 = arith.maximumf %47, %48 : vector<128x1xf32>
    %cst_23 = arith.constant 9.99999974E-6 : f32
    %50 = vector.broadcast %cst_23 : f32 to vector<128x1xf32>
    %51 = arith.addf %49, %50 : vector<128x1xf32>
    %52 = math.rsqrt %51 : vector<128x1xf32>
    %53 = vector.broadcast %43 : vector<128x1xf32> to vector<128x128xf32>
    %54 = arith.subf %36, %53 : vector<128x128xf32>
    %55 = vector.broadcast %52 : vector<128x1xf32> to vector<128x128xf32>
    %56 = arith.mulf %54, %55 : vector<128x128xf32>
    %57 = arith.truncf %56 : vector<128x128xf32> to vector<128x128xbf16>
    %c0_24 = arith.constant 0 : index
    %c0_25 = arith.constant 0 : index
    %58 = vector.load %arg6[%c0_24, %c0_25] : memref<8x128xbf16, #tpu.memory_space<vmem>>, vector<8x128xbf16>
    %cst_26 = arith.constant dense<0.000000e+00> : vector<8x128xf32>
    %59 = tpu.matmul %58, %57, %cst_26 {dimension_numbers = #tpu.dot_dimension_numbers<[1], [1], [0], [0], [0, 0, 1, 0], [], []>} : vector<8x128xbf16>, vector<128x128xbf16>, vector<8x128xf32> -> vector<8x128xf32>
    %c0_27 = arith.constant 0 : index
    %c0_28 = arith.constant 0 : index
    %60 = vector.load %arg7[%c0_27, %c0_28] : memref<8x1xf32, #tpu.memory_space<vmem>>, vector<8x1xf32>
    %61 = vector.broadcast %60 : vector<8x1xf32> to vector<8x128xf32>
    %62 = arith.addf %59, %61 : vector<8x128xf32>
    %c0_29 = arith.constant 0 : index
    %c0_30 = arith.constant 0 : index
    %63 = vector.load %arg8[%c0_29, %c0_30] : memref<8x128xf32, #tpu.memory_space<vmem>>, vector<8x128xf32>
    tpu.vector_store %arg8[%c0_29, %c0_30], %62 {strides = array<i32>} : memref<8x128xf32, #tpu.memory_space<vmem>>, vector<8x128xf32>,
    return
  }
  func.func @transform_0(%arg0: i32) -> (i32, i32) {
    %c0_i32 = arith.constant 0 : i32
    %c0_i32_0 = arith.constant 0 : i32
    return %arg0, %c0_i32 : i32, i32
  }
  func.func @transform_1(%arg0: i32) -> (i32, i32) {
    %c0_i32 = arith.constant 0 : i32
    %c0_i32_0 = arith.constant 0 : i32
    %c0_i32_1 = arith.constant 0 : i32
    return %c0_i32, %c0_i32_0 : i32, i32
  }
  func.func @transform_2(%arg0: i32) -> (i32, i32) {
    %c0_i32 = arith.constant 0 : i32
    %c0_i32_0 = arith.constant 0 : i32
    %c0_i32_1 = arith.constant 0 : i32
    return %c0_i32, %c0_i32_0 : i32, i32
  }
  func.func @transform_3(%arg0: i32) -> (i32, i32) {
    %c0_i32 = arith.constant 0 : i32
    %c0_i32_0 = arith.constant 0 : i32
    %c0_i32_1 = arith.constant 0 : i32
    return %c0_i32, %c0_i32_0 : i32, i32
  }
  func.func @transform_4(%arg0: i32) -> (i32, i32) {
    %c0_i32 = arith.constant 0 : i32
    %c0_i32_0 = arith.constant 0 : i32
    %c0_i32_1 = arith.constant 0 : i32
    return %c0_i32, %c0_i32_0 : i32, i32
  }
  func.func @transform_5(%arg0: i32) -> (i32, i32) {
    %c0_i32 = arith.constant 0 : i32
    %c0_i32_0 = arith.constant 0 : i32
    %c0_i32_1 = arith.constant 0 : i32
    return %c0_i32, %c0_i32_0 : i32, i32
  }
  func.func @transform_6(%arg0: i32) -> (i32, i32) {
    %c0_i32 = arith.constant 0 : i32
    %c0_i32_0 = arith.constant 0 : i32
    %c0_i32_1 = arith.constant 0 : i32
    return %c0_i32, %c0_i32_0 : i32, i32
  }
  func.func @transform_7(%arg0: i32) -> (i32, i32) {
    %c0_i32 = arith.constant 0 : i32
    %c0_i32_0 = arith.constant 0 : i32
    return %c0_i32, %arg0 : i32, i32
  }
}

module attributes {stable_mosaic.version = 11 : i64} {
  func.func @_dnn_kernel(%arg0: i32, %arg1: memref<128x32xf32, #tpu.memory_space<vmem>>, %arg2: memref<32x128xbf16, #tpu.memory_space<vmem>>, %arg3: memref<1x128xf32, #tpu.memory_space<vmem>>, %arg4: memref<128x128xbf16, #tpu.memory_space<vmem>>, %arg5: memref<1x128xf32, #tpu.memory_space<vmem>>, %arg6: memref<8x128xbf16, #tpu.memory_space<vmem>>, %arg7: memref<8x1xf32, #tpu.memory_space<vmem>>, %arg8: memref<8x128xf32, #tpu.memory_space<vmem>>) attributes {dimension_semantics = [#tpu.dimension_semantics<parallel>], iteration_bounds = array<i64: 1>, scalar_prefetch = 0 : i64, scratch_operands = 0 : i64, tpu.core_type = #tpu.core_type<tc>, window_params = [{transform_indices = @transform_0, window_bounds = array<i64: 128, 32>}, {pipeline_mode = #tpu.pipeline_mode<synchronous>, transform_indices = @transform_1, window_bounds = array<i64: 32, 128>}, {pipeline_mode = #tpu.pipeline_mode<synchronous>, transform_indices = @transform_2, window_bounds = array<i64: 1, 128>}, {pipeline_mode = #tpu.pipeline_mode<synchronous>, transform_indices = @transform_3, window_bounds = array<i64: 128, 128>}, {pipeline_mode = #tpu.pipeline_mode<synchronous>, transform_indices = @transform_4, window_bounds = array<i64: 1, 128>}, {pipeline_mode = #tpu.pipeline_mode<synchronous>, transform_indices = @transform_5, window_bounds = array<i64: 8, 128>}, {pipeline_mode = #tpu.pipeline_mode<synchronous>, transform_indices = @transform_6, window_bounds = array<i64: 8, 1>}, {transform_indices = @transform_7, window_bounds = array<i64: 8, 128>}]} {
    %c0 = arith.constant 0 : index
    %c0_0 = arith.constant 0 : index
    %0 = vector.load %arg1[%c0, %c0_0] : memref<128x32xf32, #tpu.memory_space<vmem>>, vector<128x32xf32>
    %1 = arith.truncf %0 : vector<128x32xf32> to vector<128x32xbf16>
    %c0_1 = arith.constant 0 : index
    %c0_2 = arith.constant 0 : index
    %2 = vector.load %arg2[%c0_1, %c0_2] : memref<32x128xbf16, #tpu.memory_space<vmem>>, vector<32x128xbf16>
    %cst = arith.constant dense<0.000000e+00> : vector<128x128xf32>
    %3 = tpu.matmul %1, %2, %cst {dimension_numbers = #tpu.dot_dimension_numbers<[1], [0], [0], [1], [0, 0, 1, 1], [], []>} : vector<128x32xbf16>, vector<32x128xbf16>, vector<128x128xf32> -> vector<128x128xf32>
    %c0_3 = arith.constant 0 : index
    %c0_4 = arith.constant 0 : index
    %4 = vector.load %arg3[%c0_3, %c0_4] : memref<1x128xf32, #tpu.memory_space<vmem>>, vector<1x128xf32>
    %5 = vector.broadcast %4 : vector<1x128xf32> to vector<128x128xf32>
    %6 = arith.addf %3, %5 : vector<128x128xf32>
    %cst_5 = arith.constant 0.000000e+00 : f32
    %7 = vector.broadcast %cst_5 : f32 to vector<128x128xf32>
    %8 = arith.maximumf %6, %7 : vector<128x128xf32>
    %cst_6 = arith.constant dense<0.000000e+00> : vector<128xf32>
    %9 = vector.multi_reduction <add>, %8, %cst_6 [1] : vector<128x128xf32> to vector<128xf32>
    %10 = vector.shape_cast %9 : vector<128xf32> to vector<128x1xf32>
    %11 = arith.mulf %8, %8 : vector<128x128xf32>
    %cst_7 = arith.constant dense<0.000000e+00> : vector<128xf32>
    %12 = vector.multi_reduction <add>, %11, %cst_7 [1] : vector<128x128xf32> to vector<128xf32>
    %13 = vector.shape_cast %12 : vector<128xf32> to vector<128x1xf32>
    %cst_8 = arith.constant 3.125000e-02 : f32
    %14 = vector.broadcast %cst_8 : f32 to vector<128x1xf32>
    %15 = arith.mulf %10, %14 : vector<128x1xf32>
    %cst_9 = arith.constant 3.125000e-02 : f32
    %16 = vector.broadcast %cst_9 : f32 to vector<128x1xf32>
    %17 = arith.mulf %13, %16 : vector<128x1xf32>
    %18 = arith.mulf %15, %15 : vector<128x1xf32>
    %19 = arith.subf %17, %18 : vector<128x1xf32>
    %cst_10 = arith.constant 0.000000e+00 : f32
    %20 = vector.broadcast %cst_10 : f32 to vector<128x1xf32>
    %21 = arith.maximumf %19, %20 : vector<128x1xf32>
    %cst_11 = arith.constant 9.99999974E-6 : f32
    %22 = vector.broadcast %cst_11 : f32 to vector<128x1xf32>
    %23 = arith.addf %21, %22 : vector<128x1xf32>
    %24 = math.rsqrt %23 : vector<128x1xf32>
    %25 = vector.broadcast %15 : vector<128x1xf32> to vector<128x128xf32>
    %26 = arith.subf %8, %25 : vector<128x128xf32>
    %27 = vector.broadcast %24 : vector<128x1xf32> to vector<128x128xf32>
    %28 = arith.mulf %26, %27 : vector<128x128xf32>
    %29 = arith.truncf %28 : vector<128x128xf32> to vector<128x128xbf16>
    %c0_12 = arith.constant 0 : index
    %c0_13 = arith.constant 0 : index
    %30 = vector.load %arg4[%c0_12, %c0_13] : memref<128x128xbf16, #tpu.memory_space<vmem>>, vector<128x128xbf16>
    %cst_14 = arith.constant dense<0.000000e+00> : vector<128x128xf32>
    %31 = tpu.matmul %29, %30, %cst_14 {dimension_numbers = #tpu.dot_dimension_numbers<[1], [0], [0], [1], [0, 0, 1, 1], [], []>} : vector<128x128xbf16>, vector<128x128xbf16>, vector<128x128xf32> -> vector<128x128xf32>
    %c0_15 = arith.constant 0 : index
    %c0_16 = arith.constant 0 : index
    %32 = vector.load %arg5[%c0_15, %c0_16] : memref<1x128xf32, #tpu.memory_space<vmem>>, vector<1x128xf32>
    %33 = vector.broadcast %32 : vector<1x128xf32> to vector<128x128xf32>
    %34 = arith.addf %31, %33 : vector<128x128xf32>
    %cst_17 = arith.constant 0.000000e+00 : f32
    %35 = vector.broadcast %cst_17 : f32 to vector<128x128xf32>
    %36 = arith.maximumf %34, %35 : vector<128x128xf32>
    %cst_18 = arith.constant dense<0.000000e+00> : vector<128xf32>
    %37 = vector.multi_reduction <add>, %36, %cst_18 [1] : vector<128x128xf32> to vector<128xf32>
    %38 = vector.shape_cast %37 : vector<128xf32> to vector<128x1xf32>
    %39 = arith.mulf %36, %36 : vector<128x128xf32>
    %cst_19 = arith.constant dense<0.000000e+00> : vector<128xf32>
    %40 = vector.multi_reduction <add>, %39, %cst_19 [1] : vector<128x128xf32> to vector<128xf32>
    %41 = vector.shape_cast %40 : vector<128xf32> to vector<128x1xf32>
    %cst_20 = arith.constant 3.125000e-02 : f32
    %42 = vector.broadcast %cst_20 : f32 to vector<128x1xf32>
    %43 = arith.mulf %38, %42 : vector<128x1xf32>
    %cst_21 = arith.constant 3.125000e-02 : f32
    %44 = vector.broadcast %cst_21 : f32 to vector<128x1xf32>
    %45 = arith.mulf %41, %44 : vector<128x1xf32>
    %46 = arith.mulf %43, %43 : vector<128x1xf32>
    %47 = arith.subf %45, %46 : vector<128x1xf32>
    %cst_22 = arith.constant 0.000000e+00 : f32
    %48 = vector.broadcast %cst_22 : f32 to vector<128x1xf32>
    %49 = arith.maximumf %47, %48 : vector<128x1xf32>
    %cst_23 = arith.constant 9.99999974E-6 : f32
    %50 = vector.broadcast %cst_23 : f32 to vector<128x1xf32>
    %51 = arith.addf %49, %50 : vector<128x1xf32>
    %52 = math.rsqrt %51 : vector<128x1xf32>
    %53 = vector.broadcast %43 : vector<128x1xf32> to vector<128x128xf32>
    %54 = arith.subf %36, %53 : vector<128x128xf32>
    %55 = vector.broadcast %52 : vector<128x1xf32> to vector<128x128xf32>
    %56 = arith.mulf %54, %55 : vector<128x128xf32>
    %57 = arith.truncf %56 : vector<128x128xf32> to vector<128x128xbf16>
    %c0_24 = arith.constant 0 : index
    %c0_25 = arith.constant 0 : index
    %58 = vector.load %arg6[%c0_24, %c0_25] : memref<8x128xbf16, #tpu.memory_space<vmem>>, vector<8x128xbf16>
    %cst_26 = arith.constant dense<0.000000e+00> : vector<8x128xf32>
    %59 = tpu.matmul %58, %57, %cst_26 {dimension_numbers = #tpu.dot_dimension_numbers<[1], [1], [0], [0], [0, 0, 1, 0], [], []>} : vector<8x128xbf16>, vector<128x128xbf16>, vector<8x128xf32> -> vector<8x128xf32>
    %c0_27 = arith.constant 0 : index
    %c0_28 = arith.constant 0 : index
    %60 = vector.load %arg7[%c0_27, %c0_28] : memref<8x1xf32, #tpu.memory_space<vmem>>, vector<8x1xf32>
    %61 = vector.broadcast %60 : vector<8x1xf32> to vector<8x128xf32>
    %62 = arith.addf %59, %61 : vector<8x128xf32>
    %c0_29 = arith.constant 0 : index
    %c0_30 = arith.constant 0 : index
    %63 = vector.load %arg8[%c0_29, %c0_30] : memref<8x128xf32, #tpu.memory_space<vmem>>, vector<8x128xf32>
    tpu.vector_store %arg8[%c0_29, %c0_30], %62 {strides = array<i32>} : memref<8x128xf32, #tpu.memory_space<vmem>>, vector<8x128xf32>,
    return
  }
  func.func @transform_0(%arg0: i32) -> (i32, i32) {
    %c0_i32 = arith.constant 0 : i32
    %c0_i32_0 = arith.constant 0 : i32
    return %arg0, %c0_i32 : i32, i32
  }
  func.func @transform_1(%arg0: i32) -> (i32, i32) {
    %c0_i32 = arith.constant 0 : i32
    %c0_i32_0 = arith.constant 0 : i32
    %c0_i32_1 = arith.constant 0 : i32
    return %c0_i32, %c0_i32_0 : i32, i32
  }
  func.func @transform_2(%arg0: i32) -> (i32, i32) {
    %c0_i32 = arith.constant 0 : i32
    %c0_i32_0 = arith.constant 0 : i32
    %c0_i32_1 = arith.constant 0 : i32
    return %c0_i32, %c0_i32_0 : i32, i32
  }
  func.func @transform_3(%arg0: i32) -> (i32, i32) {
    %c0_i32 = arith.constant 0 : i32
    %c0_i32_0 = arith.constant 0 : i32
    %c0_i32_1 = arith.constant 0 : i32
    return %c0_i32, %c0_i32_0 : i32, i32
  }
  func.func @transform_4(%arg0: i32) -> (i32, i32) {
    %c0_i32 = arith.constant 0 : i32
    %c0_i32_0 = arith.constant 0 : i32
    %c0_i32_1 = arith.constant 0 : i32
    return %c0_i32, %c0_i32_0 : i32, i32
  }
  func.func @transform_5(%arg0: i32) -> (i32, i32) {
    %c0_i32 = arith.constant 0 : i32
    %c0_i32_0 = arith.constant 0 : i32
    %c0_i32_1 = arith.constant 0 : i32
    return %c0_i32, %c0_i32_0 : i32, i32
  }
  func.func @transform_6(%arg0: i32) -> (i32, i32) {
    %c0_i32 = arith.constant 0 : i32
    %c0_i32_0 = arith.constant 0 : i32
    %c0_i32_1 = arith.constant 0 : i32
    return %c0_i32, %c0_i32_0 : i32, i32
  }
  func.func @transform_7(%arg0: i32) -> (i32, i32) {
    %c0_i32 = arith.constant 0 : i32
    %c0_i32_0 = arith.constant 0 : i32
    return %c0_i32, %arg0 : i32, i32
  }
}

</mosaic_0001>

<llo_original>
// kernel: tpu_custom_call.1
$region0: #{tpu_custom_call.1}
  #allocation0 [shape = 'u32[]', space=smem, size = 0x4, offset = 0x4, fixed_abs, tag = 'smem constant byte address 0x4 - core index']
  #allocation1 [shape = 'u32[144,128]{1,0:T(1,128)}', space=vmem, size = 0x12000, scoped, tag = 'internal scratch']
  %s0 = inlined_call_operand.vmem [shape: f32[128,32], index: 0, kind: input, shape index: {}]
  %s1 = inlined_call_operand.vmem [shape: bf16[32,128], index: 1, kind: input, shape index: {}]
  %s2 = inlined_call_operand.vmem [shape: f32[1,128], index: 2, kind: input, shape index: {}]
  %s3 = inlined_call_operand.vmem [shape: bf16[128,128], index: 3, kind: input, shape index: {}]
  %s4 = inlined_call_operand.vmem [shape: f32[1,128], index: 4, kind: input, shape index: {}]
  %s5 = inlined_call_operand.vmem [shape: bf16[8,128], index: 5, kind: input, shape index: {}]
  %s6 = inlined_call_operand.vmem [shape: f32[8,1], index: 6, kind: input, shape index: {}]
  %s7 = inlined_call_operand.hbm [shape: f32[8,128], index: 7, kind: output, shape index: {}]
  %s8 = sld [smem:[#allocation0]]
  $region38: #{tpu_custom_call.1} parent=0
    _
  %s10 = ssub.s32 1, %s8
  %s11 = scalar_select 0, %s10, %s8
  $region1: #{tpu_custom_call.1} parent=0
    #allocation2 [shape = 'u8[4096]{0}', space=vmem, size = 0x1000, scoped, tag = 'output window, operand 0, single buffered']
    #allocation3 [shape = 's32[1]{0}', space=sflag, size = 0x4, scoped, tag = 'scoped memory for tpu_custom_call.1']
    %12 = vsyncpa [#allocation3], 0
    // Predicated region
    $region2: #{tpu_custom_call.1} parent=1 // pred_check
      _
    $region3: #{tpu_custom_call.1} parent=1 // pred_check_branch
      %14 = sbr.rel (0) target = $region5
    $region4: #{tpu_custom_call.1} parent=1 // pred_region
      _
    $region5: #{tpu_custom_call.1} parent=1 // pred_fallthru
      _
    // Predicated region
    $region6: #{tpu_custom_call.1} parent=1 // pred_check
      _
    $region7: #{tpu_custom_call.1} parent=1 // pred_check_branch
      %16 = sbr.rel (0) target = $region9
    $region8: #{tpu_custom_call.1} parent=1 // pred_region
      _
    $region9: #{tpu_custom_call.1} parent=1 // pred_fallthru
      _
    // Predicated region
    $region10: #{tpu_custom_call.1} parent=1 // pred_check
      _
    $region11: #{tpu_custom_call.1} parent=1 // pred_check_branch
      %18 = sbr.rel (0) target = $region13
    $region12: #{tpu_custom_call.1} parent=1 // pred_region
      _
    $region13: #{tpu_custom_call.1} parent=1 // pred_fallthru
      _
    // Predicated region
    $region14: #{tpu_custom_call.1} parent=1 // pred_check
      _
    $region15: #{tpu_custom_call.1} parent=1 // pred_check_branch
      %20 = sbr.rel (0) target = $region17
    $region16: #{tpu_custom_call.1} parent=1 // pred_region
      _
    $region17: #{tpu_custom_call.1} parent=1 // pred_fallthru
      _
    // Predicated region
    $region18: #{tpu_custom_call.1} parent=1 // pred_check
      _
    $region19: #{tpu_custom_call.1} parent=1 // pred_check_branch
      %22 = sbr.rel (0) target = $region21
    $region20: #{tpu_custom_call.1} parent=1 // pred_region
      _
    $region21: #{tpu_custom_call.1} parent=1 // pred_fallthru
      _
    // Predicated region
    $region22: #{tpu_custom_call.1} parent=1 // pred_check
      _
    $region23: #{tpu_custom_call.1} parent=1 // pred_check_branch
      %24 = sbr.rel (0) target = $region25
    $region24: #{tpu_custom_call.1} parent=1 // pred_region
      _
    $region25: #{tpu_custom_call.1} parent=1 // pred_fallthru
      _
    // Predicated region
    $region26: #{tpu_custom_call.1} parent=1 // pred_check
      _
    $region27: #{tpu_custom_call.1} parent=1 // pred_check_branch
      %26 = sbr.rel (0) target = $region29
    $region28: #{tpu_custom_call.1} parent=1 // pred_region
      _
    $region29: #{tpu_custom_call.1} parent=1 // pred_fallthru
      _
    %v28 = vld [vmem:[%s0] sm:$0xff]
    %v29 = vld [vmem:[%s0 + $0x8] sm:$0xff]
    %v30 = vld [vmem:[%s0 + $0x10] sm:$0xff]
    %v31 = vld [vmem:[%s0 + $0x18] sm:$0xff]
    %v32 = vld [vmem:[%s0 + $0x20] sm:$0xff]
    %v33 = vld [vmem:[%s0 + $0x28] sm:$0xff]
    %v34 = vld [vmem:[%s0 + $0x30] sm:$0xff]
    %v35 = vld [vmem:[%s0 + $0x38] sm:$0xff]
    %v36 = vld [vmem:[%s0 + $0x40] sm:$0xff]
    %v37 = vld [vmem:[%s0 + $0x48] sm:$0xff]
    %v38 = vld [vmem:[%s0 + $0x50] sm:$0xff]
    %v39 = vld [vmem:[%s0 + $0x58] sm:$0xff]
    %v40 = vld [vmem:[%s0 + $0x60] sm:$0xff]
    %v41 = vld [vmem:[%s0 + $0x68] sm:$0xff]
    %v42 = vld [vmem:[%s0 + $0x70] sm:$0xff]
    %v43 = vld [vmem:[%s0 + $0x78] sm:$0xff]
    %v44 = vpack.c.bf16 %v29, %v28
    %v45 = vpack.c.bf16 %v31, %v30
    %v46 = vpack.c.bf16 %v33, %v32
    %v47 = vpack.c.bf16 %v35, %v34
    %v48 = vpack.c.bf16 %v37, %v36
    %v49 = vpack.c.bf16 %v39, %v38
    %v50 = vpack.c.bf16 %v41, %v40
    %v51 = vpack.c.bf16 %v43, %v42
    %v52 = vld [vmem:[%s1] sm:$0xf]
    %v53 = vld [vmem:[%s1 + $0x4] sm:$0xf]
    %v54 = vld [vmem:[%s1 + $0x8] sm:$0xf]
    %v55 = vld [vmem:[%s1 + $0xc] sm:$0xf]
    %v56 = vld [vmem:[%s2] sm:$0x1]
    %v58 = vlaneseq
    %v59 = vshrl.u32 %v58, 7
    %v60 = vsub.s32 0, %v59
    %v61 = vrot.slane %v56, %v60
    %v67 = vunpack.c.l.b16 %v52
    %v68 = vunpack.c.l.b16 %v53
    %v69 = vunpack.c.l.b16 %v54
    %v70 = vunpack.c.l.b16 %v55
    %v71 = vpack.c.b16 %v68, %v67
    %v72 = vpack.c.b16 %v70, %v69
    %vm75 = vcmask 261120
    %v77 = vsel %vm75, %v44, 0
    %v80 = vsel %vm75, %v45, 0
    %v83 = vsel %vm75, %v46, 0
    %v86 = vsel %vm75, %v47, 0
    %v89 = vsel %vm75, %v48, 0
    %v92 = vsel %vm75, %v49, 0
    %v95 = vsel %vm75, %v50, 0
    %v98 = vsel %vm75, %v51, 0
    %100 = vmatprep.subr.bf16.mxu0 0
    %101 = vmatpush1.bf16.msra.mxu0 %v71
    %102 = vmatprep.subr.bf16.mxu0 0
    %103 = vmatpush1.bf16.msra.mxu0 %v72
    %104 = vmatprep.subr.bf16.mxu0 0
    %105 = vmatpush1.bf16.msra.mxu0 0
    %106 = vmatprep.subr.bf16.mxu0 0
    %107 = vmatpush1.bf16.msra.mxu0 0
    %108 = vmatprep.subr.bf16.mxu0 0
    %109 = vmatpush1.bf16.msra.mxu0 0
    %110 = vmatprep.subr.bf16.mxu0 0
    %111 = vmatpush1.bf16.msra.mxu0 0
    %112 = vmatprep.subr.bf16.mxu0 0
    %113 = vmatpush1.bf16.msra.mxu0 0
    %114 = vmatprep.subr.bf16.mxu0 0
    %115 = vmatpush1.bf16.msra.mxu0 0
    %116 = vmatprep.subr.bf16.mxu0 0
    %117 = vmatpush1.bf16.msra.mxu0 0
    %118 = vmatprep.subr.bf16.mxu0 0
    %119 = vmatpush1.bf16.msra.mxu0 0
    %120 = vmatprep.subr.bf16.mxu0 0
    %121 = vmatpush1.bf16.msra.mxu0 0
    %122 = vmatprep.subr.bf16.mxu0 0
    %123 = vmatpush1.bf16.msra.mxu0 0
    %124 = vmatprep.subr.bf16.mxu0 0
    %125 = vmatpush1.bf16.msra.mxu0 0
    %126 = vmatprep.subr.bf16.mxu0 0
    %127 = vmatpush1.bf16.msra.mxu0 0
    %128 = vmatprep.subr.bf16.mxu0 0
    %129 = vmatpush1.bf16.msra.mxu0 0
    %130 = vmatprep.subr.bf16.mxu0 0
    %131 = vmatpush1.bf16.msra.mxu0 0
    %132 = vmatprep.mubr.bf16.mxu0 0
    %133 = vmatmul.mubr.bf16.gmra.mrb[0].mxu0 %v77
    %v134 = vpop.f32.mrb[0].mxu0
    %v135 = vadd.f32 %v61, %v134
    %v136 = vpop.f32.mrb[0].mxu0
    %v137 = vpop.f32.mrb[0].mxu0
    %v138 = vadd.f32 %v61, %v137
    %v139 = vpop.f32.mrb[0].mxu0
    %140 = vmatprep.mubr.bf16.mxu0 0
    %141 = vmatmul.mubr.bf16.gmra.mrb[0].mxu0 %v80
    %v142 = vpop.f32.mrb[0].mxu0
    %v143 = vadd.f32 %v61, %v142
    %v144 = vpop.f32.mrb[0].mxu0
    %v145 = vpop.f32.mrb[0].mxu0
    %v146 = vadd.f32 %v61, %v145
    %v147 = vpop.f32.mrb[0].mxu0
    %148 = vmatprep.mubr.bf16.mxu0 0
    %149 = vmatmul.mubr.bf16.gmra.mrb[0].mxu0 %v83
    %v150 = vpop.f32.mrb[0].mxu0
    %v151 = vadd.f32 %v61, %v150
    %v152 = vpop.f32.mrb[0].mxu0
    %v153 = vpop.f32.mrb[0].mxu0
    %v154 = vadd.f32 %v61, %v153
    %v155 = vpop.f32.mrb[0].mxu0
    %156 = vmatprep.mubr.bf16.mxu0 0
    %157 = vmatmul.mubr.bf16.gmra.mrb[0].mxu0 %v86
    %v158 = vpop.f32.mrb[0].mxu0
    %v159 = vadd.f32 %v61, %v158
    %v160 = vpop.f32.mrb[0].mxu0
    %v161 = vpop.f32.mrb[0].mxu0
    %v162 = vadd.f32 %v61, %v161
    %v163 = vpop.f32.mrb[0].mxu0
    %164 = vmatprep.mubr.bf16.mxu0 0
    %165 = vmatmul.mubr.bf16.gmra.mrb[0].mxu0 %v89
    %v166 = vpop.f32.mrb[0].mxu0
    %v167 = vadd.f32 %v61, %v166
    %v168 = vpop.f32.mrb[0].mxu0
    %v169 = vpop.f32.mrb[0].mxu0
    %v170 = vadd.f32 %v61, %v169
    %v171 = vpop.f32.mrb[0].mxu0
    %172 = vmatprep.mubr.bf16.mxu0 0
    %173 = vmatmul.mubr.bf16.gmra.mrb[0].mxu0 %v92
    %v174 = vpop.f32.mrb[0].mxu0
    %v175 = vadd.f32 %v61, %v174
    %v176 = vpop.f32.mrb[0].mxu0
    %v177 = vpop.f32.mrb[0].mxu0
    %v178 = vadd.f32 %v61, %v177
    %v179 = vpop.f32.mrb[0].mxu0
    %180 = vmatprep.mubr.bf16.mxu0 0
    %181 = vmatmul.mubr.bf16.gmra.mrb[0].mxu0 %v95
    %v182 = vpop.f32.mrb[0].mxu0
    %v183 = vadd.f32 %v61, %v182
    %v184 = vpop.f32.mrb[0].mxu0
    %v185 = vpop.f32.mrb[0].mxu0
    %v186 = vadd.f32 %v61, %v185
    %v187 = vpop.f32.mrb[0].mxu0
    %188 = vmatprep.mubr.bf16.mxu0 0
    %189 = vmatmul.mubr.bf16.gmra.mrb[0].mxu0 %v98
    %v190 = vpop.f32.mrb[0].mxu0
    %v191 = vadd.f32 %v61, %v190
    %v192 = vpop.f32.mrb[0].mxu0
    %v193 = vpop.f32.mrb[0].mxu0
    %v194 = vadd.f32 %v61, %v193
    %v195 = vpop.f32.mrb[0].mxu0
    %196 = vdwg.mxu0
    %v197 = vmax.f32 %v135, 0.0
    %v198 = vmax.f32 %v138, 0.0
    %v199 = vmax.f32 %v143, 0.0
    %v200 = vmax.f32 %v146, 0.0
    %v201 = vmax.f32 %v151, 0.0
    %v202 = vmax.f32 %v154, 0.0
    %v203 = vmax.f32 %v159, 0.0
    %v204 = vmax.f32 %v162, 0.0
    %v205 = vmax.f32 %v167, 0.0
    %v206 = vmax.f32 %v170, 0.0
    %v207 = vmax.f32 %v175, 0.0
    %v208 = vmax.f32 %v178, 0.0
    %v209 = vmax.f32 %v183, 0.0
    %v210 = vmax.f32 %v186, 0.0
    %v211 = vmax.f32 %v191, 0.0
    %v212 = vmax.f32 %v194, 0.0
    %213 = vadd.xlane.f32.xlu0 %v197
    %v214 = vpop.xlane.xlu0 %213
    %215 = vadd.xlane.f32.xlu0 %v198
    %v216 = vpop.xlane.xlu0 %215
    %217 = vadd.xlane.f32.xlu0 %v199
    %v218 = vpop.xlane.xlu0 %217
    %219 = vadd.xlane.f32.xlu0 %v200
    %v220 = vpop.xlane.xlu0 %219
    %221 = vadd.xlane.f32.xlu0 %v201
    %v222 = vpop.xlane.xlu0 %221
    %223 = vadd.xlane.f32.xlu0 %v202
    %v224 = vpop.xlane.xlu0 %223
    %225 = vadd.xlane.f32.xlu0 %v203
    %v226 = vpop.xlane.xlu0 %225
    %227 = vadd.xlane.f32.xlu0 %v204
    %v228 = vpop.xlane.xlu0 %227
    %229 = vadd.xlane.f32.xlu0 %v205
    %v230 = vpop.xlane.xlu0 %229
    %231 = vadd.xlane.f32.xlu0 %v206
    %v232 = vpop.xlane.xlu0 %231
    %233 = vadd.xlane.f32.xlu0 %v207
    %v234 = vpop.xlane.xlu0 %233
    %235 = vadd.xlane.f32.xlu0 %v208
    %v236 = vpop.xlane.xlu0 %235
    %237 = vadd.xlane.f32.xlu0 %v209
    %v238 = vpop.xlane.xlu0 %237
    %239 = vadd.xlane.f32.xlu0 %v210
    %v240 = vpop.xlane.xlu0 %239
    %241 = vadd.xlane.f32.xlu0 %v211
    %v242 = vpop.xlane.xlu0 %241
    %243 = vadd.xlane.f32.xlu0 %v212
    %v244 = vpop.xlane.xlu0 %243
    %v245 = vmul.f32 %v197, %v197
    %v246 = vmul.f32 %v198, %v198
    %v247 = vmul.f32 %v199, %v199
    %v248 = vmul.f32 %v200, %v200
    %v249 = vmul.f32 %v201, %v201
    %v250 = vmul.f32 %v202, %v202
    %v251 = vmul.f32 %v203, %v203
    %v252 = vmul.f32 %v204, %v204
    %v253 = vmul.f32 %v205, %v205
    %v254 = vmul.f32 %v206, %v206
    %v255 = vmul.f32 %v207, %v207
    %v256 = vmul.f32 %v208, %v208
    %v257 = vmul.f32 %v209, %v209
    %v258 = vmul.f32 %v210, %v210
    %v259 = vmul.f32 %v211, %v211
    %v260 = vmul.f32 %v212, %v212
    %261 = vadd.xlane.f32.xlu0 %v245
    %v262 = vpop.xlane.xlu0 %261
    %263 = vadd.xlane.f32.xlu0 %v246
    %v264 = vpop.xlane.xlu0 %263
    %265 = vadd.xlane.f32.xlu0 %v247
    %v266 = vpop.xlane.xlu0 %265
    %267 = vadd.xlane.f32.xlu0 %v248
    %v268 = vpop.xlane.xlu0 %267
    %269 = vadd.xlane.f32.xlu0 %v249
    %v270 = vpop.xlane.xlu0 %269
    %271 = vadd.xlane.f32.xlu0 %v250
    %v272 = vpop.xlane.xlu0 %271
    %273 = vadd.xlane.f32.xlu0 %v251
    %v274 = vpop.xlane.xlu0 %273
    %275 = vadd.xlane.f32.xlu0 %v252
    %v276 = vpop.xlane.xlu0 %275
    %277 = vadd.xlane.f32.xlu0 %v253
    %v278 = vpop.xlane.xlu0 %277
    %279 = vadd.xlane.f32.xlu0 %v254
    %v280 = vpop.xlane.xlu0 %279
    %281 = vadd.xlane.f32.xlu0 %v255
    %v282 = vpop.xlane.xlu0 %281
    %283 = vadd.xlane.f32.xlu0 %v256
    %v284 = vpop.xlane.xlu0 %283
    %285 = vadd.xlane.f32.xlu0 %v257
    %v286 = vpop.xlane.xlu0 %285
    %287 = vadd.xlane.f32.xlu0 %v258
    %v288 = vpop.xlane.xlu0 %287
    %289 = vadd.xlane.f32.xlu0 %v259
    %v290 = vpop.xlane.xlu0 %289
    %291 = vadd.xlane.f32.xlu0 %v260
    %v292 = vpop.xlane.xlu0 %291
    %v293 = vmul.f32 %v214, 0.03125
    %v294 = vmul.f32 %v216, 0.03125
    %v295 = vmul.f32 %v218, 0.03125
    %v296 = vmul.f32 %v220, 0.03125
    %v297 = vmul.f32 %v222, 0.03125
    %v298 = vmul.f32 %v224, 0.03125
    %v299 = vmul.f32 %v226, 0.03125
    %v300 = vmul.f32 %v228, 0.03125
    %v301 = vmul.f32 %v230, 0.03125
    %v302 = vmul.f32 %v232, 0.03125
    %v303 = vmul.f32 %v234, 0.03125
    %v304 = vmul.f32 %v236, 0.03125
    %v305 = vmul.f32 %v238, 0.03125
    %v306 = vmul.f32 %v240, 0.03125
    %v307 = vmul.f32 %v242, 0.03125
    %v308 = vmul.f32 %v244, 0.03125
    %v309 = vmul.f32 %v262, 0.03125
    %v310 = vmul.f32 %v264, 0.03125
    %v311 = vmul.f32 %v266, 0.03125
    %v312 = vmul.f32 %v268, 0.03125
    %v313 = vmul.f32 %v270, 0.03125
    %v314 = vmul.f32 %v272, 0.03125
    %v315 = vmul.f32 %v274, 0.03125
    %v316 = vmul.f32 %v276, 0.03125
    %v317 = vmul.f32 %v278, 0.03125
    %v318 = vmul.f32 %v280, 0.03125
    %v319 = vmul.f32 %v282, 0.03125
    %v320 = vmul.f32 %v284, 0.03125
    %v321 = vmul.f32 %v286, 0.03125
    %v322 = vmul.f32 %v288, 0.03125
    %v323 = vmul.f32 %v290, 0.03125
    %v324 = vmul.f32 %v292, 0.03125
    %v325 = vmul.f32 %v293, %v293
    %v326 = vmul.f32 %v294, %v294
    %v327 = vmul.f32 %v295, %v295
    %v328 = vmul.f32 %v296, %v296
    %v329 = vmul.f32 %v297, %v297
    %v330 = vmul.f32 %v298, %v298
    %v331 = vmul.f32 %v299, %v299
    %v332 = vmul.f32 %v300, %v300
    %v333 = vmul.f32 %v301, %v301
    %v334 = vmul.f32 %v302, %v302
    %v335 = vmul.f32 %v303, %v303
    %v336 = vmul.f32 %v304, %v304
    %v337 = vmul.f32 %v305, %v305
    %v338 = vmul.f32 %v306, %v306
    %v339 = vmul.f32 %v307, %v307
    %v340 = vmul.f32 %v308, %v308
    %v341 = vsub.f32 %v309, %v325
    %v342 = vsub.f32 %v310, %v326
    %v343 = vsub.f32 %v311, %v327
    %v344 = vsub.f32 %v312, %v328
    %v345 = vsub.f32 %v313, %v329
    %v346 = vsub.f32 %v314, %v330
    %v347 = vsub.f32 %v315, %v331
    %v348 = vsub.f32 %v316, %v332
    %v349 = vsub.f32 %v317, %v333
    %v350 = vsub.f32 %v318, %v334
    %v351 = vsub.f32 %v319, %v335
    %v352 = vsub.f32 %v320, %v336
    %v353 = vsub.f32 %v321, %v337
    %v354 = vsub.f32 %v322, %v338
    %v355 = vsub.f32 %v323, %v339
    %v356 = vsub.f32 %v324, %v340
    %v357 = vmax.f32 %v341, 0.0
    %v358 = vmax.f32 %v342, 0.0
    %v359 = vmax.f32 %v343, 0.0
    %v360 = vmax.f32 %v344, 0.0
    %v361 = vmax.f32 %v345, 0.0
    %v362 = vmax.f32 %v346, 0.0
    %v363 = vmax.f32 %v347, 0.0
    %v364 = vmax.f32 %v348, 0.0
    %v365 = vmax.f32 %v349, 0.0
    %v366 = vmax.f32 %v350, 0.0
    %v367 = vmax.f32 %v351, 0.0
    %v368 = vmax.f32 %v352, 0.0
    %v369 = vmax.f32 %v353, 0.0
    %v370 = vmax.f32 %v354, 0.0
    %v371 = vmax.f32 %v355, 0.0
    %v372 = vmax.f32 %v356, 0.0
    %v373 = vadd.f32 %v357, 1e-05
    %v374 = vadd.f32 %v358, 1e-05
    %v375 = vadd.f32 %v359, 1e-05
    %v376 = vadd.f32 %v360, 1e-05
    %v377 = vadd.f32 %v361, 1e-05
    %v378 = vadd.f32 %v362, 1e-05
    %v379 = vadd.f32 %v363, 1e-05
    %v380 = vadd.f32 %v364, 1e-05
    %v381 = vadd.f32 %v365, 1e-05
    %v382 = vadd.f32 %v366, 1e-05
    %v383 = vadd.f32 %v367, 1e-05
    %v384 = vadd.f32 %v368, 1e-05
    %v385 = vadd.f32 %v369, 1e-05
    %v386 = vadd.f32 %v370, 1e-05
    %v387 = vadd.f32 %v371, 1e-05
    %v388 = vadd.f32 %v372, 1e-05
    %v389 = vrsqrt.pop %v373
    %v390 = vrsqrt.pop %v374
    %v391 = vrsqrt.pop %v375
    %v392 = vrsqrt.pop %v376
    %v393 = vrsqrt.pop %v377
    %v394 = vrsqrt.pop %v378
    %v395 = vrsqrt.pop %v379
    %v396 = vrsqrt.pop %v380
    %v397 = vrsqrt.pop %v381
    %v398 = vrsqrt.pop %v382
    %v399 = vrsqrt.pop %v383
    %v400 = vrsqrt.pop %v384
    %v401 = vrsqrt.pop %v385
    %v402 = vrsqrt.pop %v386
    %v403 = vrsqrt.pop %v387
    %v404 = vrsqrt.pop %v388
    %v405 = vsub.f32 %v197, %v293
    %v406 = vsub.f32 %v198, %v294
    %v407 = vsub.f32 %v199, %v295
    %v408 = vsub.f32 %v200, %v296
    %v409 = vsub.f32 %v201, %v297
    %v410 = vsub.f32 %v202, %v298
    %v411 = vsub.f32 %v203, %v299
    %v412 = vsub.f32 %v204, %v300
    %v413 = vsub.f32 %v205, %v301
    %v414 = vsub.f32 %v206, %v302
    %v415 = vsub.f32 %v207, %v303
    %v416 = vsub.f32 %v208, %v304
    %v417 = vsub.f32 %v209, %v305
    %v418 = vsub.f32 %v210, %v306
    %v419 = vsub.f32 %v211, %v307
    %v420 = vsub.f32 %v212, %v308
    %v421 = vmul.f32 %v405, %v389
    %v422 = vmul.f32 %v406, %v390
    %v423 = vmul.f32 %v407, %v391
    %v424 = vmul.f32 %v408, %v392
    %v425 = vmul.f32 %v409, %v393
    %v426 = vmul.f32 %v410, %v394
    %v427 = vmul.f32 %v411, %v395
    %v428 = vmul.f32 %v412, %v396
    %v429 = vmul.f32 %v413, %v397
    %v430 = vmul.f32 %v414, %v398
    %v431 = vmul.f32 %v415, %v399
    %v432 = vmul.f32 %v416, %v400
    %v433 = vmul.f32 %v417, %v401
    %v434 = vmul.f32 %v418, %v402
    %v435 = vmul.f32 %v419, %v403
    %v436 = vmul.f32 %v420, %v404
    %v437 = vpack.c.bf16 %v422, %v421
    %v438 = vpack.c.bf16 %v424, %v423
    %v439 = vpack.c.bf16 %v426, %v425
    %v440 = vpack.c.bf16 %v428, %v427
    %v441 = vpack.c.bf16 %v430, %v429
    %v442 = vpack.c.bf16 %v432, %v431
    %v443 = vpack.c.bf16 %v434, %v433
    %v444 = vpack.c.bf16 %v436, %v435
    %v445 = vld [vmem:[%s3] sm:$0xf]
    %v446 = vld [vmem:[%s3 + $0x4] sm:$0xf]
    %v447 = vld [vmem:[%s3 + $0x8] sm:$0xf]
    %v448 = vld [vmem:[%s3 + $0xc] sm:$0xf]
    %v449 = vld [vmem:[%s3 + $0x10] sm:$0xf]
    %v450 = vld [vmem:[%s3 + $0x14] sm:$0xf]
    %v451 = vld [vmem:[%s3 + $0x18] sm:$0xf]
    %v452 = vld [vmem:[%s3 + $0x1c] sm:$0xf]
    %v453 = vld [vmem:[%s3 + $0x20] sm:$0xf]
    %v454 = vld [vmem:[%s3 + $0x24] sm:$0xf]
    %v455 = vld [vmem:[%s3 + $0x28] sm:$0xf]
    %v456 = vld [vmem:[%s3 + $0x2c] sm:$0xf]
    %v457 = vld [vmem:[%s3 + $0x30] sm:$0xf]
    %v458 = vld [vmem:[%s3 + $0x34] sm:$0xf]
    %v459 = vld [vmem:[%s3 + $0x38] sm:$0xf]
    %v460 = vld [vmem:[%s3 + $0x3c] sm:$0xf]
    %v461 = vld [vmem:[%s4] sm:$0x1]
    %v463 = vlaneseq
    %v464 = vshrl.u32 %v463, 7
    %v465 = vsub.s32 0, %v464
    %v466 = vrot.slane %v461, %v465
    %v484 = vunpack.c.l.b16 %v445
    %v485 = vunpack.c.l.b16 %v446
    %v486 = vunpack.c.l.b16 %v447
    %v487 = vunpack.c.l.b16 %v448
    %v488 = vunpack.c.l.b16 %v449
    %v489 = vunpack.c.l.b16 %v450
    %v490 = vunpack.c.l.b16 %v451
    %v491 = vunpack.c.l.b16 %v452
    %v492 = vunpack.c.l.b16 %v453
    %v493 = vunpack.c.l.b16 %v454
    %v494 = vunpack.c.l.b16 %v455
    %v495 = vunpack.c.l.b16 %v456
    %v496 = vunpack.c.l.b16 %v457
    %v497 = vunpack.c.l.b16 %v458
    %v498 = vunpack.c.l.b16 %v459
    %v499 = vunpack.c.l.b16 %v460
    %v500 = vpack.c.b16 %v485, %v484
    %v501 = vpack.c.b16 %v487, %v486
    %v502 = vpack.c.b16 %v489, %v488
    %v503 = vpack.c.b16 %v491, %v490
    %v504 = vpack.c.b16 %v493, %v492
    %v505 = vpack.c.b16 %v495, %v494
    %v506 = vpack.c.b16 %v497, %v496
    %v507 = vpack.c.b16 %v499, %v498
    %516 = vmatprep.subr.bf16.mxu0 0
    %517 = vmatpush1.bf16.msra.mxu0 %v500
    %518 = vmatprep.subr.bf16.mxu0 0
    %519 = vmatpush1.bf16.msra.mxu0 %v501
    %520 = vmatprep.subr.bf16.mxu0 0
    %521 = vmatpush1.bf16.msra.mxu0 %v502
    %522 = vmatprep.subr.bf16.mxu0 0
    %523 = vmatpush1.bf16.msra.mxu0 %v503
    %524 = vmatprep.subr.bf16.mxu0 0
    %525 = vmatpush1.bf16.msra.mxu0 %v504
    %526 = vmatprep.subr.bf16.mxu0 0
    %527 = vmatpush1.bf16.msra.mxu0 %v505
    %528 = vmatprep.subr.bf16.mxu0 0
    %529 = vmatpush1.bf16.msra.mxu0 %v506
    %530 = vmatprep.subr.bf16.mxu0 0
    %531 = vmatpush1.bf16.msra.mxu0 %v507
    %532 = vmatprep.subr.bf16.mxu0 0
    %533 = vmatpush1.bf16.msra.mxu0 0
    %534 = vmatprep.subr.bf16.mxu0 0
    %535 = vmatpush1.bf16.msra.mxu0 0
    %536 = vmatprep.subr.bf16.mxu0 0
    %537 = vmatpush1.bf16.msra.mxu0 0
    %538 = vmatprep.subr.bf16.mxu0 0
    %539 = vmatpush1.bf16.msra.mxu0 0
    %540 = vmatprep.subr.bf16.mxu0 0
    %541 = vmatpush1.bf16.msra.mxu0 0
    %542 = vmatprep.subr.bf16.mxu0 0
    %543 = vmatpush1.bf16.msra.mxu0 0
    %544 = vmatprep.subr.bf16.mxu0 0
    %545 = vmatpush1.bf16.msra.mxu0 0
    %546 = vmatprep.subr.bf16.mxu0 0
    %547 = vmatpush1.bf16.msra.mxu0 0
    %548 = vmatprep.mubr.bf16.mxu0 0
    %549 = vmatmul.mubr.bf16.gmra.mrb[0].mxu0 %v437
    %v550 = vpop.f32.mrb[0].mxu0
    %v551 = vadd.f32 %v466, %v550
    %v552 = vpop.f32.mrb[0].mxu0
    %v553 = vpop.f32.mrb[0].mxu0
    %v554 = vadd.f32 %v466, %v553
    %v555 = vpop.f32.mrb[0].mxu0
    %556 = vmatprep.mubr.bf16.mxu0 0
    %557 = vmatmul.mubr.bf16.gmra.mrb[0].mxu0 %v438
    %v558 = vpop.f32.mrb[0].mxu0
    %v559 = vadd.f32 %v466, %v558
    %v560 = vpop.f32.mrb[0].mxu0
    %v561 = vpop.f32.mrb[0].mxu0
    %v562 = vadd.f32 %v466, %v561
    %v563 = vpop.f32.mrb[0].mxu0
    %564 = vmatprep.mubr.bf16.mxu0 0
    %565 = vmatmul.mubr.bf16.gmra.mrb[0].mxu0 %v439
    %v566 = vpop.f32.mrb[0].mxu0
    %v567 = vadd.f32 %v466, %v566
    %v568 = vpop.f32.mrb[0].mxu0
    %v569 = vpop.f32.mrb[0].mxu0
    %v570 = vadd.f32 %v466, %v569
    %v571 = vpop.f32.mrb[0].mxu0
    %572 = vmatprep.mubr.bf16.mxu0 0
    %573 = vmatmul.mubr.bf16.gmra.mrb[0].mxu0 %v440
    %v574 = vpop.f32.mrb[0].mxu0
    %v575 = vadd.f32 %v466, %v574
    %v576 = vpop.f32.mrb[0].mxu0
    %v577 = vpop.f32.mrb[0].mxu0
    %v578 = vadd.f32 %v466, %v577
    %v579 = vpop.f32.mrb[0].mxu0
    %580 = vmatprep.mubr.bf16.mxu0 0
    %581 = vmatmul.mubr.bf16.gmra.mrb[0].mxu0 %v441
    %v582 = vpop.f32.mrb[0].mxu0
    %v583 = vadd.f32 %v466, %v582
    %v584 = vpop.f32.mrb[0].mxu0
    %v585 = vpop.f32.mrb[0].mxu0
    %v586 = vadd.f32 %v466, %v585
    %v587 = vpop.f32.mrb[0].mxu0
    %588 = vmatprep.mubr.bf16.mxu0 0
    %589 = vmatmul.mubr.bf16.gmra.mrb[0].mxu0 %v442
    %v590 = vpop.f32.mrb[0].mxu0
    %v591 = vadd.f32 %v466, %v590
    %v592 = vpop.f32.mrb[0].mxu0
    %v593 = vpop.f32.mrb[0].mxu0
    %v594 = vadd.f32 %v466, %v593
    %v595 = vpop.f32.mrb[0].mxu0
    %596 = vmatprep.mubr.bf16.mxu0 0
    %597 = vmatmul.mubr.bf16.gmra.mrb[0].mxu0 %v443
    %v598 = vpop.f32.mrb[0].mxu0
    %v599 = vadd.f32 %v466, %v598
    %v600 = vpop.f32.mrb[0].mxu0
    %v601 = vpop.f32.mrb[0].mxu0
    %v602 = vadd.f32 %v466, %v601
    %v603 = vpop.f32.mrb[0].mxu0
    %604 = vmatprep.mubr.bf16.mxu0 0
    %605 = vmatmul.mubr.bf16.gmra.mrb[0].mxu0 %v444
    %v606 = vpop.f32.mrb[0].mxu0
    %v607 = vadd.f32 %v466, %v606
    %v608 = vpop.f32.mrb[0].mxu0
    %v609 = vpop.f32.mrb[0].mxu0
    %v610 = vadd.f32 %v466, %v609
    %v611 = vpop.f32.mrb[0].mxu0
    %612 = vdwg.mxu0
    %v613 = vmax.f32 %v551, 0.0
    %v614 = vmax.f32 %v554, 0.0
    %v615 = vmax.f32 %v559, 0.0
    %v616 = vmax.f32 %v562, 0.0
    %v617 = vmax.f32 %v567, 0.0
    %v618 = vmax.f32 %v570, 0.0
    %v619 = vmax.f32 %v575, 0.0
    %v620 = vmax.f32 %v578, 0.0
    %v621 = vmax.f32 %v583, 0.0
    %v622 = vmax.f32 %v586, 0.0
    %v623 = vmax.f32 %v591, 0.0
    %v624 = vmax.f32 %v594, 0.0
    %v625 = vmax.f32 %v599, 0.0
    %v626 = vmax.f32 %v602, 0.0
    %v627 = vmax.f32 %v607, 0.0
    %v628 = vmax.f32 %v610, 0.0
    %629 = vadd.xlane.f32.xlu0 %v613
    %v630 = vpop.xlane.xlu0 %629
    %631 = vadd.xlane.f32.xlu0 %v614
    %v632 = vpop.xlane.xlu0 %631
    %633 = vadd.xlane.f32.xlu0 %v615
    %v634 = vpop.xlane.xlu0 %633
    %635 = vadd.xlane.f32.xlu0 %v616
    %v636 = vpop.xlane.xlu0 %635
    %637 = vadd.xlane.f32.xlu0 %v617
    %v638 = vpop.xlane.xlu0 %637
    %639 = vadd.xlane.f32.xlu0 %v618
    %v640 = vpop.xlane.xlu0 %639
    %641 = vadd.xlane.f32.xlu0 %v619
    %v642 = vpop.xlane.xlu0 %641
    %643 = vadd.xlane.f32.xlu0 %v620
    %v644 = vpop.xlane.xlu0 %643
    %645 = vadd.xlane.f32.xlu0 %v621
    %v646 = vpop.xlane.xlu0 %645
    %647 = vadd.xlane.f32.xlu0 %v622
    %v648 = vpop.xlane.xlu0 %647
    %649 = vadd.xlane.f32.xlu0 %v623
    %v650 = vpop.xlane.xlu0 %649
    %651 = vadd.xlane.f32.xlu0 %v624
    %v652 = vpop.xlane.xlu0 %651
    %653 = vadd.xlane.f32.xlu0 %v625
    %v654 = vpop.xlane.xlu0 %653
    %655 = vadd.xlane.f32.xlu0 %v626
    %v656 = vpop.xlane.xlu0 %655
    %657 = vadd.xlane.f32.xlu0 %v627
    %v658 = vpop.xlane.xlu0 %657
    %659 = vadd.xlane.f32.xlu0 %v628
    %v660 = vpop.xlane.xlu0 %659
    %v661 = vmul.f32 %v613, %v613
    %v662 = vmul.f32 %v614, %v614
    %v663 = vmul.f32 %v615, %v615
    %v664 = vmul.f32 %v616, %v616
    %v665 = vmul.f32 %v617, %v617
    %v666 = vmul.f32 %v618, %v618
    %v667 = vmul.f32 %v619, %v619
    %v668 = vmul.f32 %v620, %v620
    %v669 = vmul.f32 %v621, %v621
    %v670 = vmul.f32 %v622, %v622
    %v671 = vmul.f32 %v623, %v623
    %v672 = vmul.f32 %v624, %v624
    %v673 = vmul.f32 %v625, %v625
    %v674 = vmul.f32 %v626, %v626
    %v675 = vmul.f32 %v627, %v627
    %v676 = vmul.f32 %v628, %v628
    %677 = vadd.xlane.f32.xlu0 %v661
    %v678 = vpop.xlane.xlu0 %677
    %679 = vadd.xlane.f32.xlu0 %v662
    %v680 = vpop.xlane.xlu0 %679
    %681 = vadd.xlane.f32.xlu0 %v663
    %v682 = vpop.xlane.xlu0 %681
    %683 = vadd.xlane.f32.xlu0 %v664
    %v684 = vpop.xlane.xlu0 %683
    %685 = vadd.xlane.f32.xlu0 %v665
    %v686 = vpop.xlane.xlu0 %685
    %687 = vadd.xlane.f32.xlu0 %v666
    %v688 = vpop.xlane.xlu0 %687
    %689 = vadd.xlane.f32.xlu0 %v667
    %v690 = vpop.xlane.xlu0 %689
    %691 = vadd.xlane.f32.xlu0 %v668
    %v692 = vpop.xlane.xlu0 %691
    %693 = vadd.xlane.f32.xlu0 %v669
    %v694 = vpop.xlane.xlu0 %693
    %695 = vadd.xlane.f32.xlu0 %v670
    %v696 = vpop.xlane.xlu0 %695
    %697 = vadd.xlane.f32.xlu0 %v671
    %v698 = vpop.xlane.xlu0 %697
    %699 = vadd.xlane.f32.xlu0 %v672
    %v700 = vpop.xlane.xlu0 %699
    %701 = vadd.xlane.f32.xlu0 %v673
    %v702 = vpop.xlane.xlu0 %701
    %703 = vadd.xlane.f32.xlu0 %v674
    %v704 = vpop.xlane.xlu0 %703
    %705 = vadd.xlane.f32.xlu0 %v675
    %v706 = vpop.xlane.xlu0 %705
    %707 = vadd.xlane.f32.xlu0 %v676
    %v708 = vpop.xlane.xlu0 %707
    %v709 = vmul.f32 %v630, 0.03125
    %v710 = vmul.f32 %v632, 0.03125
    %v711 = vmul.f32 %v634, 0.03125
    %v712 = vmul.f32 %v636, 0.03125
    %v713 = vmul.f32 %v638, 0.03125
    %v714 = vmul.f32 %v640, 0.03125
    %v715 = vmul.f32 %v642, 0.03125
    %v716 = vmul.f32 %v644, 0.03125
    %v717 = vmul.f32 %v646, 0.03125
    %v718 = vmul.f32 %v648, 0.03125
    %v719 = vmul.f32 %v650, 0.03125
    %v720 = vmul.f32 %v652, 0.03125
    %v721 = vmul.f32 %v654, 0.03125
    %v722 = vmul.f32 %v656, 0.03125
    %v723 = vmul.f32 %v658, 0.03125
    %v724 = vmul.f32 %v660, 0.03125
    %v725 = vmul.f32 %v678, 0.03125
    %v726 = vmul.f32 %v680, 0.03125
    %v727 = vmul.f32 %v682, 0.03125
    %v728 = vmul.f32 %v684, 0.03125
    %v729 = vmul.f32 %v686, 0.03125
    %v730 = vmul.f32 %v688, 0.03125
    %v731 = vmul.f32 %v690, 0.03125
    %v732 = vmul.f32 %v692, 0.03125
    %v733 = vmul.f32 %v694, 0.03125
    %v734 = vmul.f32 %v696, 0.03125
    %v735 = vmul.f32 %v698, 0.03125
    %v736 = vmul.f32 %v700, 0.03125
    %v737 = vmul.f32 %v702, 0.03125
    %v738 = vmul.f32 %v704, 0.03125
    %v739 = vmul.f32 %v706, 0.03125
    %v740 = vmul.f32 %v708, 0.03125
    %v741 = vmul.f32 %v709, %v709
    %v742 = vmul.f32 %v710, %v710
    %v743 = vmul.f32 %v711, %v711
    %v744 = vmul.f32 %v712, %v712
    %v745 = vmul.f32 %v713, %v713
    %v746 = vmul.f32 %v714, %v714
    %v747 = vmul.f32 %v715, %v715
    %v748 = vmul.f32 %v716, %v716
    %v749 = vmul.f32 %v717, %v717
    %v750 = vmul.f32 %v718, %v718
    %v751 = vmul.f32 %v719, %v719
    %v752 = vmul.f32 %v720, %v720
    %v753 = vmul.f32 %v721, %v721
    %v754 = vmul.f32 %v722, %v722
    %v755 = vmul.f32 %v723, %v723
    %v756 = vmul.f32 %v724, %v724
    %v757 = vsub.f32 %v725, %v741
    %v758 = vsub.f32 %v726, %v742
    %v759 = vsub.f32 %v727, %v743
    %v760 = vsub.f32 %v728, %v744
    %v761 = vsub.f32 %v729, %v745
    %v762 = vsub.f32 %v730, %v746
    %v763 = vsub.f32 %v731, %v747
    %v764 = vsub.f32 %v732, %v748
    %v765 = vsub.f32 %v733, %v749
    %v766 = vsub.f32 %v734, %v750
    %v767 = vsub.f32 %v735, %v751
    %v768 = vsub.f32 %v736, %v752
    %v769 = vsub.f32 %v737, %v753
    %v770 = vsub.f32 %v738, %v754
    %v771 = vsub.f32 %v739, %v755
    %v772 = vsub.f32 %v740, %v756
    %v773 = vmax.f32 %v757, 0.0
    %v774 = vmax.f32 %v758, 0.0
    %v775 = vmax.f32 %v759, 0.0
    %v776 = vmax.f32 %v760, 0.0
    %v777 = vmax.f32 %v761, 0.0
    %v778 = vmax.f32 %v762, 0.0
    %v779 = vmax.f32 %v763, 0.0
    %v780 = vmax.f32 %v764, 0.0
    %v781 = vmax.f32 %v765, 0.0
    %v782 = vmax.f32 %v766, 0.0
    %v783 = vmax.f32 %v767, 0.0
    %v784 = vmax.f32 %v768, 0.0
    %v785 = vmax.f32 %v769, 0.0
    %v786 = vmax.f32 %v770, 0.0
    %v787 = vmax.f32 %v771, 0.0
    %v788 = vmax.f32 %v772, 0.0
    %v789 = vadd.f32 %v773, 1e-05
    %v790 = vadd.f32 %v774, 1e-05
    %v791 = vadd.f32 %v775, 1e-05
    %v792 = vadd.f32 %v776, 1e-05
    %v793 = vadd.f32 %v777, 1e-05
    %v794 = vadd.f32 %v778, 1e-05
    %v795 = vadd.f32 %v779, 1e-05
    %v796 = vadd.f32 %v780, 1e-05
    %v797 = vadd.f32 %v781, 1e-05
    %v798 = vadd.f32 %v782, 1e-05
    %v799 = vadd.f32 %v783, 1e-05
    %v800 = vadd.f32 %v784, 1e-05
    %v801 = vadd.f32 %v785, 1e-05
    %v802 = vadd.f32 %v786, 1e-05
    %v803 = vadd.f32 %v787, 1e-05
    %v804 = vadd.f32 %v788, 1e-05
    %v805 = vrsqrt.pop %v789
    %v806 = vrsqrt.pop %v790
    %v807 = vrsqrt.pop %v791
    %v808 = vrsqrt.pop %v792
    %v809 = vrsqrt.pop %v793
    %v810 = vrsqrt.pop %v794
    %v811 = vrsqrt.pop %v795
    %v812 = vrsqrt.pop %v796
    %v813 = vrsqrt.pop %v797
    %v814 = vrsqrt.pop %v798
    %v815 = vrsqrt.pop %v799
    %v816 = vrsqrt.pop %v800
    %v817 = vrsqrt.pop %v801
    %v818 = vrsqrt.pop %v802
    %v819 = vrsqrt.pop %v803
    %v820 = vrsqrt.pop %v804
    %v821 = vsub.f32 %v613, %v709
    %v822 = vsub.f32 %v614, %v710
    %v823 = vsub.f32 %v615, %v711
    %v824 = vsub.f32 %v616, %v712
    %v825 = vsub.f32 %v617, %v713
    %v826 = vsub.f32 %v618, %v714
    %v827 = vsub.f32 %v619, %v715
    %v828 = vsub.f32 %v620, %v716
    %v829 = vsub.f32 %v621, %v717
    %v830 = vsub.f32 %v622, %v718
    %v831 = vsub.f32 %v623, %v719
    %v832 = vsub.f32 %v624, %v720
    %v833 = vsub.f32 %v625, %v721
    %v834 = vsub.f32 %v626, %v722
    %v835 = vsub.f32 %v627, %v723
    %v836 = vsub.f32 %v628, %v724
    %v837 = vmul.f32 %v821, %v805
    %v838 = vmul.f32 %v822, %v806
    %v839 = vmul.f32 %v823, %v807
    %v840 = vmul.f32 %v824, %v808
    %v841 = vmul.f32 %v825, %v809
    %v842 = vmul.f32 %v826, %v810
    %v843 = vmul.f32 %v827, %v811
    %v844 = vmul.f32 %v828, %v812
    %v845 = vmul.f32 %v829, %v813
    %v846 = vmul.f32 %v830, %v814
    %v847 = vmul.f32 %v831, %v815
    %v848 = vmul.f32 %v832, %v816
    %v849 = vmul.f32 %v833, %v817
    %v850 = vmul.f32 %v834, %v818
    %v851 = vmul.f32 %v835, %v819
    %v852 = vmul.f32 %v836, %v820
    %v853 = vpack.c.bf16 %v838, %v837
    %v854 = vpack.c.bf16 %v840, %v839
    %v855 = vpack.c.bf16 %v842, %v841
    %v856 = vpack.c.bf16 %v844, %v843
    %v857 = vpack.c.bf16 %v846, %v845
    %v858 = vpack.c.bf16 %v848, %v847
    %v859 = vpack.c.bf16 %v850, %v849
    %v860 = vpack.c.bf16 %v852, %v851
    %v861 = vld [vmem:[%s5] sm:$0xf]
    %v862 = vld [vmem:[%s6] sm:$0xff]
    %864 = vset.pattern.permute.xlu0 0
    %865 = vperm.xlu0 %864, %v862
    %v866 = vpop.permute.xlu0 %865
    %868 = vmatprep.subr.bf16.mxu0 0
    %869 = vmatpush1.bf16.xpose.msra.mxu0 %v853
    %870 = vmatprep.subr.bf16.mxu0 0
    %871 = vmatpush1.bf16.xpose.msra.mxu0 %v854
    %872 = vmatprep.subr.bf16.mxu0 0
    %873 = vmatpush1.bf16.xpose.msra.mxu0 %v855
    %874 = vmatprep.subr.bf16.mxu0 0
    %875 = vmatpush1.bf16.xpose.msra.mxu0 %v856
    %876 = vmatprep.subr.bf16.mxu0 0
    %877 = vmatpush1.bf16.xpose.msra.mxu0 %v857
    %878 = vmatprep.subr.bf16.mxu0 0
    %879 = vmatpush1.bf16.xpose.msra.mxu0 %v858
    %880 = vmatprep.subr.bf16.mxu0 0
    %881 = vmatpush1.bf16.xpose.msra.mxu0 %v859
    %882 = vmatprep.subr.bf16.mxu0 0
    %883 = vmatpush1.bf16.xpose.msra.mxu0 %v860
    %884 = vmatprep.subr.bf16.mxu0 0
    %885 = vmatpush1.bf16.xpose.msra.mxu0 0
    %886 = vmatprep.subr.bf16.mxu0 0
    %887 = vmatpush1.bf16.xpose.msra.mxu0 0
    %888 = vmatprep.subr.bf16.mxu0 0
    %889 = vmatpush1.bf16.xpose.msra.mxu0 0
    %890 = vmatprep.subr.bf16.mxu0 0
    %891 = vmatpush1.bf16.xpose.msra.mxu0 0
    %892 = vmatprep.subr.bf16.mxu0 0
    %893 = vmatpush1.bf16.xpose.msra.mxu0 0
    %894 = vmatprep.subr.bf16.mxu0 0
    %895 = vmatpush1.bf16.xpose.msra.mxu0 0
    %896 = vmatprep.subr.bf16.mxu0 0
    %897 = vmatpush1.bf16.xpose.msra.mxu0 0
    %898 = vmatprep.subr.bf16.mxu0 0
    %899 = vmatpush1.bf16.xpose.msra.mxu0 0
    %900 = vmatprep.mubr.bf16.mxu0 0
    %901 = vmatmul.mubr.bf16.gmra.mrb[0].mxu0 %v861
    %v902 = vpop.f32.mrb[0].mxu0
    %v903 = vadd.f32 %v866, %v902
    %v904 = vpop.f32.mrb[0].mxu0
    %v905 = vpop.f32.mrb[0].mxu0
    %v906 = vpop.f32.mrb[0].mxu0
    %907 = vdwg.mxu0
    %908 = vst [vmem:[#allocation2] sm:$0xff] %v903
    // Predicated region
    $region30: #{tpu_custom_call.1} parent=1 // pred_check
      _
    $region31: #{tpu_custom_call.1} parent=1 // pred_check_branch
      %910 = sbr.rel (0) target = $region33
    $region32: #{tpu_custom_call.1} parent=1 // pred_region
      %s912 = ssub.s32 128, 128
      %913 = vsyncadd [#allocation3], %s912
      %s915 = sshll.u32 [#allocation2], 4
      %s916 = int_to_ptr.vmem [resolvable:$true] %s915
      %918 = dma.vmem_to_hbm [thread:$0]  %s916, 128, %s7, [#allocation3]
    $region33: #{tpu_custom_call.1} parent=1 // pred_fallthru
      _
    // Predicated region
    $region34: #{tpu_custom_call.1} parent=1 // pred_check
      _
    $region35: #{tpu_custom_call.1} parent=1 // pred_check_branch
      %920 = sbr.rel (0) target = $region37
    $region36: #{tpu_custom_call.1} parent=1 // pred_region
      %921 = dma.done [#allocation3], 128
    $region37: #{tpu_custom_call.1} parent=1 // pred_fallthru
      _
    %922 = vsyncpa [#allocation3], 1

// kernel: tpu_custom_call.1
$region0: #{tpu_custom_call.1}
  #allocation0 [shape = 'u32[]', space=smem, size = 0x4, offset = 0x4, fixed_abs, tag = 'smem constant byte address 0x4 - core index']
  #allocation1 [shape = 'u32[144,128]{1,0:T(1,128)}', space=vmem, size = 0x12000, scoped, tag = 'internal scratch']
  %s0 = inlined_call_operand.vmem [shape: f32[128,32], index: 0, kind: input, shape index: {}]
  %s1 = inlined_call_operand.vmem [shape: bf16[32,128], index: 1, kind: input, shape index: {}]
  %s2 = inlined_call_operand.vmem [shape: f32[1,128], index: 2, kind: input, shape index: {}]
  %s3 = inlined_call_operand.vmem [shape: bf16[128,128], index: 3, kind: input, shape index: {}]
  %s4 = inlined_call_operand.vmem [shape: f32[1,128], index: 4, kind: input, shape index: {}]
  %s5 = inlined_call_operand.vmem [shape: bf16[8,128], index: 5, kind: input, shape index: {}]
  %s6 = inlined_call_operand.vmem [shape: f32[8,1], index: 6, kind: input, shape index: {}]
  %s7 = inlined_call_operand.hbm [shape: f32[8,128], index: 7, kind: output, shape index: {}]
  %s8 = sld [smem:[#allocation0]]
  $region38: #{tpu_custom_call.1} parent=0
    _
  %s10 = ssub.s32 1, %s8
  %s11 = scalar_select 0, %s10, %s8
  $region1: #{tpu_custom_call.1} parent=0
    #allocation2 [shape = 'u8[4096]{0}', space=vmem, size = 0x1000, scoped, tag = 'output window, operand 0, single buffered']
    #allocation3 [shape = 's32[1]{0}', space=sflag, size = 0x4, scoped, tag = 'scoped memory for tpu_custom_call.1']
    %12 = vsyncpa [#allocation3], 0
    // Predicated region
    $region2: #{tpu_custom_call.1} parent=1 // pred_check
      _
    $region3: #{tpu_custom_call.1} parent=1 // pred_check_branch
      %14 = sbr.rel (0) target = $region5
    $region4: #{tpu_custom_call.1} parent=1 // pred_region
      _
    $region5: #{tpu_custom_call.1} parent=1 // pred_fallthru
      _
    // Predicated region
    $region6: #{tpu_custom_call.1} parent=1 // pred_check
      _
    $region7: #{tpu_custom_call.1} parent=1 // pred_check_branch
      %16 = sbr.rel (0) target = $region9
    $region8: #{tpu_custom_call.1} parent=1 // pred_region
      _
    $region9: #{tpu_custom_call.1} parent=1 // pred_fallthru
      _
    // Predicated region
    $region10: #{tpu_custom_call.1} parent=1 // pred_check
      _
    $region11: #{tpu_custom_call.1} parent=1 // pred_check_branch
      %18 = sbr.rel (0) target = $region13
    $region12: #{tpu_custom_call.1} parent=1 // pred_region
      _
    $region13: #{tpu_custom_call.1} parent=1 // pred_fallthru
      _
    // Predicated region
    $region14: #{tpu_custom_call.1} parent=1 // pred_check
      _
    $region15: #{tpu_custom_call.1} parent=1 // pred_check_branch
      %20 = sbr.rel (0) target = $region17
    $region16: #{tpu_custom_call.1} parent=1 // pred_region
      _
    $region17: #{tpu_custom_call.1} parent=1 // pred_fallthru
      _
    // Predicated region
    $region18: #{tpu_custom_call.1} parent=1 // pred_check
      _
    $region19: #{tpu_custom_call.1} parent=1 // pred_check_branch
      %22 = sbr.rel (0) target = $region21
    $region20: #{tpu_custom_call.1} parent=1 // pred_region
      _
    $region21: #{tpu_custom_call.1} parent=1 // pred_fallthru
      _
    // Predicated region
    $region22: #{tpu_custom_call.1} parent=1 // pred_check
      _
    $region23: #{tpu_custom_call.1} parent=1 // pred_check_branch
      %24 = sbr.rel (0) target = $region25
    $region24: #{tpu_custom_call.1} parent=1 // pred_region
      _
    $region25: #{tpu_custom_call.1} parent=1 // pred_fallthru
      _
    // Predicated region
    $region26: #{tpu_custom_call.1} parent=1 // pred_check
      _
    $region27: #{tpu_custom_call.1} parent=1 // pred_check_branch
      %26 = sbr.rel (0) target = $region29
    $region28: #{tpu_custom_call.1} parent=1 // pred_region
      _
    $region29: #{tpu_custom_call.1} parent=1 // pred_fallthru
      _
    %v28 = vld [vmem:[%s0] sm:$0xff]
    %v29 = vld [vmem:[%s0 + $0x8] sm:$0xff]
    %v30 = vld [vmem:[%s0 + $0x10] sm:$0xff]
    %v31 = vld [vmem:[%s0 + $0x18] sm:$0xff]
    %v32 = vld [vmem:[%s0 + $0x20] sm:$0xff]
    %v33 = vld [vmem:[%s0 + $0x28] sm:$0xff]
    %v34 = vld [vmem:[%s0 + $0x30] sm:$0xff]
    %v35 = vld [vmem:[%s0 + $0x38] sm:$0xff]
    %v36 = vld [vmem:[%s0 + $0x40] sm:$0xff]
    %v37 = vld [vmem:[%s0 + $0x48] sm:$0xff]
    %v38 = vld [vmem:[%s0 + $0x50] sm:$0xff]
    %v39 = vld [vmem:[%s0 + $0x58] sm:$0xff]
    %v40 = vld [vmem:[%s0 + $0x60] sm:$0xff]
    %v41 = vld [vmem:[%s0 + $0x68] sm:$0xff]
    %v42 = vld [vmem:[%s0 + $0x70] sm:$0xff]
    %v43 = vld [vmem:[%s0 + $0x78] sm:$0xff]
    %v44 = vpack.c.bf16 %v29, %v28
    %v45 = vpack.c.bf16 %v31, %v30
    %v46 = vpack.c.bf16 %v33, %v32
    %v47 = vpack.c.bf16 %v35, %v34
    %v48 = vpack.c.bf16 %v37, %v36
    %v49 = vpack.c.bf16 %v39, %v38
    %v50 = vpack.c.bf16 %v41, %v40
    %v51 = vpack.c.bf16 %v43, %v42
    %v52 = vld [vmem:[%s1] sm:$0xf]
    %v53 = vld [vmem:[%s1 + $0x4] sm:$0xf]
    %v54 = vld [vmem:[%s1 + $0x8] sm:$0xf]
    %v55 = vld [vmem:[%s1 + $0xc] sm:$0xf]
    %v56 = vld [vmem:[%s2] sm:$0x1]
    %v58 = vlaneseq
    %v59 = vshrl.u32 %v58, 7
    %v60 = vsub.s32 0, %v59
    %v61 = vrot.slane %v56, %v60
    %v67 = vunpack.c.l.b16 %v52
    %v68 = vunpack.c.l.b16 %v53
    %v69 = vunpack.c.l.b16 %v54
    %v70 = vunpack.c.l.b16 %v55
    %v71 = vpack.c.b16 %v68, %v67
    %v72 = vpack.c.b16 %v70, %v69
    %vm75 = vcmask 261120
    %v77 = vsel %vm75, %v44, 0
    %v80 = vsel %vm75, %v45, 0
    %v83 = vsel %vm75, %v46, 0
    %v86 = vsel %vm75, %v47, 0
    %v89 = vsel %vm75, %v48, 0
    %v92 = vsel %vm75, %v49, 0
    %v95 = vsel %vm75, %v50, 0
    %v98 = vsel %vm75, %v51, 0
    %100 = vmatprep.subr.bf16.mxu0 0
    %101 = vmatpush1.bf16.msra.mxu0 %v71
    %102 = vmatprep.subr.bf16.mxu0 0
    %103 = vmatpush1.bf16.msra.mxu0 %v72
    %104 = vmatprep.subr.bf16.mxu0 0
    %105 = vmatpush1.bf16.msra.mxu0 0
    %106 = vmatprep.subr.bf16.mxu0 0
    %107 = vmatpush1.bf16.msra.mxu0 0
    %108 = vmatprep.subr.bf16.mxu0 0
    %109 = vmatpush1.bf16.msra.mxu0 0
    %110 = vmatprep.subr.bf16.mxu0 0
    %111 = vmatpush1.bf16.msra.mxu0 0
    %112 = vmatprep.subr.bf16.mxu0 0
    %113 = vmatpush1.bf16.msra.mxu0 0
    %114 = vmatprep.subr.bf16.mxu0 0
    %115 = vmatpush1.bf16.msra.mxu0 0
    %116 = vmatprep.subr.bf16.mxu0 0
    %117 = vmatpush1.bf16.msra.mxu0 0
    %118 = vmatprep.subr.bf16.mxu0 0
    %119 = vmatpush1.bf16.msra.mxu0 0
    %120 = vmatprep.subr.bf16.mxu0 0
    %121 = vmatpush1.bf16.msra.mxu0 0
    %122 = vmatprep.subr.bf16.mxu0 0
    %123 = vmatpush1.bf16.msra.mxu0 0
    %124 = vmatprep.subr.bf16.mxu0 0
    %125 = vmatpush1.bf16.msra.mxu0 0
    %126 = vmatprep.subr.bf16.mxu0 0
    %127 = vmatpush1.bf16.msra.mxu0 0
    %128 = vmatprep.subr.bf16.mxu0 0
    %129 = vmatpush1.bf16.msra.mxu0 0
    %130 = vmatprep.subr.bf16.mxu0 0
    %131 = vmatpush1.bf16.msra.mxu0 0
    %132 = vmatprep.mubr.bf16.mxu0 0
    %133 = vmatmul.mubr.bf16.gmra.mrb[0].mxu0 %v77
    %v134 = vpop.f32.mrb[0].mxu0
    %v135 = vadd.f32 %v61, %v134
    %v136 = vpop.f32.mrb[0].mxu0
    %v137 = vpop.f32.mrb[0].mxu0
    %v138 = vadd.f32 %v61, %v137
    %v139 = vpop.f32.mrb[0].mxu0
    %140 = vmatprep.mubr.bf16.mxu0 0
    %141 = vmatmul.mubr.bf16.gmra.mrb[0].mxu0 %v80
    %v142 = vpop.f32.mrb[0].mxu0
    %v143 = vadd.f32 %v61, %v142
    %v144 = vpop.f32.mrb[0].mxu0
    %v145 = vpop.f32.mrb[0].mxu0
    %v146 = vadd.f32 %v61, %v145
    %v147 = vpop.f32.mrb[0].mxu0
    %148 = vmatprep.mubr.bf16.mxu0 0
    %149 = vmatmul.mubr.bf16.gmra.mrb[0].mxu0 %v83
    %v150 = vpop.f32.mrb[0].mxu0
    %v151 = vadd.f32 %v61, %v150
    %v152 = vpop.f32.mrb[0].mxu0
    %v153 = vpop.f32.mrb[0].mxu0
    %v154 = vadd.f32 %v61, %v153
    %v155 = vpop.f32.mrb[0].mxu0
    %156 = vmatprep.mubr.bf16.mxu0 0
    %157 = vmatmul.mubr.bf16.gmra.mrb[0].mxu0 %v86
    %v158 = vpop.f32.mrb[0].mxu0
    %v159 = vadd.f32 %v61, %v158
    %v160 = vpop.f32.mrb[0].mxu0
    %v161 = vpop.f32.mrb[0].mxu0
    %v162 = vadd.f32 %v61, %v161
    %v163 = vpop.f32.mrb[0].mxu0
    %164 = vmatprep.mubr.bf16.mxu0 0
    %165 = vmatmul.mubr.bf16.gmra.mrb[0].mxu0 %v89
    %v166 = vpop.f32.mrb[0].mxu0
    %v167 = vadd.f32 %v61, %v166
    %v168 = vpop.f32.mrb[0].mxu0
    %v169 = vpop.f32.mrb[0].mxu0
    %v170 = vadd.f32 %v61, %v169
    %v171 = vpop.f32.mrb[0].mxu0
    %172 = vmatprep.mubr.bf16.mxu0 0
    %173 = vmatmul.mubr.bf16.gmra.mrb[0].mxu0 %v92
    %v174 = vpop.f32.mrb[0].mxu0
    %v175 = vadd.f32 %v61, %v174
    %v176 = vpop.f32.mrb[0].mxu0
    %v177 = vpop.f32.mrb[0].mxu0
    %v178 = vadd.f32 %v61, %v177
    %v179 = vpop.f32.mrb[0].mxu0
    %180 = vmatprep.mubr.bf16.mxu0 0
    %181 = vmatmul.mubr.bf16.gmra.mrb[0].mxu0 %v95
    %v182 = vpop.f32.mrb[0].mxu0
    %v183 = vadd.f32 %v61, %v182
    %v184 = vpop.f32.mrb[0].mxu0
    %v185 = vpop.f32.mrb[0].mxu0
    %v186 = vadd.f32 %v61, %v185
    %v187 = vpop.f32.mrb[0].mxu0
    %188 = vmatprep.mubr.bf16.mxu0 0
    %189 = vmatmul.mubr.bf16.gmra.mrb[0].mxu0 %v98
    %v190 = vpop.f32.mrb[0].mxu0
    %v191 = vadd.f32 %v61, %v190
    %v192 = vpop.f32.mrb[0].mxu0
    %v193 = vpop.f32.mrb[0].mxu0
    %v194 = vadd.f32 %v61, %v193
    %v195 = vpop.f32.mrb[0].mxu0
    %196 = vdwg.mxu0
    %v197 = vmax.f32 %v135, 0.0
    %v198 = vmax.f32 %v138, 0.0
    %v199 = vmax.f32 %v143, 0.0
    %v200 = vmax.f32 %v146, 0.0
    %v201 = vmax.f32 %v151, 0.0
    %v202 = vmax.f32 %v154, 0.0
    %v203 = vmax.f32 %v159, 0.0
    %v204 = vmax.f32 %v162, 0.0
    %v205 = vmax.f32 %v167, 0.0
    %v206 = vmax.f32 %v170, 0.0
    %v207 = vmax.f32 %v175, 0.0
    %v208 = vmax.f32 %v178, 0.0
    %v209 = vmax.f32 %v183, 0.0
    %v210 = vmax.f32 %v186, 0.0
    %v211 = vmax.f32 %v191, 0.0
    %v212 = vmax.f32 %v194, 0.0
    %213 = vadd.xlane.f32.xlu0 %v197
    %v214 = vpop.xlane.xlu0 %213
    %215 = vadd.xlane.f32.xlu0 %v198
    %v216 = vpop.xlane.xlu0 %215
    %217 = vadd.xlane.f32.xlu0 %v199
    %v218 = vpop.xlane.xlu0 %217
    %219 = vadd.xlane.f32.xlu0 %v200
    %v220 = vpop.xlane.xlu0 %219
    %221 = vadd.xlane.f32.xlu0 %v201
    %v222 = vpop.xlane.xlu0 %221
    %223 = vadd.xlane.f32.xlu0 %v202
    %v224 = vpop.xlane.xlu0 %223
    %225 = vadd.xlane.f32.xlu0 %v203
    %v226 = vpop.xlane.xlu0 %225
    %227 = vadd.xlane.f32.xlu0 %v204
    %v228 = vpop.xlane.xlu0 %227
    %229 = vadd.xlane.f32.xlu0 %v205
    %v230 = vpop.xlane.xlu0 %229
    %231 = vadd.xlane.f32.xlu0 %v206
    %v232 = vpop.xlane.xlu0 %231
    %233 = vadd.xlane.f32.xlu0 %v207
    %v234 = vpop.xlane.xlu0 %233
    %235 = vadd.xlane.f32.xlu0 %v208
    %v236 = vpop.xlane.xlu0 %235
    %237 = vadd.xlane.f32.xlu0 %v209
    %v238 = vpop.xlane.xlu0 %237
    %239 = vadd.xlane.f32.xlu0 %v210
    %v240 = vpop.xlane.xlu0 %239
    %241 = vadd.xlane.f32.xlu0 %v211
    %v242 = vpop.xlane.xlu0 %241
    %243 = vadd.xlane.f32.xlu0 %v212
    %v244 = vpop.xlane.xlu0 %243
    %v245 = vmul.f32 %v197, %v197
    %v246 = vmul.f32 %v198, %v198
    %v247 = vmul.f32 %v199, %v199
    %v248 = vmul.f32 %v200, %v200
    %v249 = vmul.f32 %v201, %v201
    %v250 = vmul.f32 %v202, %v202
    %v251 = vmul.f32 %v203, %v203
    %v252 = vmul.f32 %v204, %v204
    %v253 = vmul.f32 %v205, %v205
    %v254 = vmul.f32 %v206, %v206
    %v255 = vmul.f32 %v207, %v207
    %v256 = vmul.f32 %v208, %v208
    %v257 = vmul.f32 %v209, %v209
    %v258 = vmul.f32 %v210, %v210
    %v259 = vmul.f32 %v211, %v211
    %v260 = vmul.f32 %v212, %v212
    %261 = vadd.xlane.f32.xlu0 %v245
    %v262 = vpop.xlane.xlu0 %261
    %263 = vadd.xlane.f32.xlu0 %v246
    %v264 = vpop.xlane.xlu0 %263
    %265 = vadd.xlane.f32.xlu0 %v247
    %v266 = vpop.xlane.xlu0 %265
    %267 = vadd.xlane.f32.xlu0 %v248
    %v268 = vpop.xlane.xlu0 %267
    %269 = vadd.xlane.f32.xlu0 %v249
    %v270 = vpop.xlane.xlu0 %269
    %271 = vadd.xlane.f32.xlu0 %v250
    %v272 = vpop.xlane.xlu0 %271
    %273 = vadd.xlane.f32.xlu0 %v251
    %v274 = vpop.xlane.xlu0 %273
    %275 = vadd.xlane.f32.xlu0 %v252
    %v276 = vpop.xlane.xlu0 %275
    %277 = vadd.xlane.f32.xlu0 %v253
    %v278 = vpop.xlane.xlu0 %277
    %279 = vadd.xlane.f32.xlu0 %v254
    %v280 = vpop.xlane.xlu0 %279
    %281 = vadd.xlane.f32.xlu0 %v255
    %v282 = vpop.xlane.xlu0 %281
    %283 = vadd.xlane.f32.xlu0 %v256
    %v284 = vpop.xlane.xlu0 %283
    %285 = vadd.xlane.f32.xlu0 %v257
    %v286 = vpop.xlane.xlu0 %285
    %287 = vadd.xlane.f32.xlu0 %v258
    %v288 = vpop.xlane.xlu0 %287
    %289 = vadd.xlane.f32.xlu0 %v259
    %v290 = vpop.xlane.xlu0 %289
    %291 = vadd.xlane.f32.xlu0 %v260
    %v292 = vpop.xlane.xlu0 %291
    %v293 = vmul.f32 %v214, 0.03125
    %v294 = vmul.f32 %v216, 0.03125
    %v295 = vmul.f32 %v218, 0.03125
    %v296 = vmul.f32 %v220, 0.03125
    %v297 = vmul.f32 %v222, 0.03125
    %v298 = vmul.f32 %v224, 0.03125
    %v299 = vmul.f32 %v226, 0.03125
    %v300 = vmul.f32 %v228, 0.03125
    %v301 = vmul.f32 %v230, 0.03125
    %v302 = vmul.f32 %v232, 0.03125
    %v303 = vmul.f32 %v234, 0.03125
    %v304 = vmul.f32 %v236, 0.03125
    %v305 = vmul.f32 %v238, 0.03125
    %v306 = vmul.f32 %v240, 0.03125
    %v307 = vmul.f32 %v242, 0.03125
    %v308 = vmul.f32 %v244, 0.03125
    %v309 = vmul.f32 %v262, 0.03125
    %v310 = vmul.f32 %v264, 0.03125
    %v311 = vmul.f32 %v266, 0.03125
    %v312 = vmul.f32 %v268, 0.03125
    %v313 = vmul.f32 %v270, 0.03125
    %v314 = vmul.f32 %v272, 0.03125
    %v315 = vmul.f32 %v274, 0.03125
    %v316 = vmul.f32 %v276, 0.03125
    %v317 = vmul.f32 %v278, 0.03125
    %v318 = vmul.f32 %v280, 0.03125
    %v319 = vmul.f32 %v282, 0.03125
    %v320 = vmul.f32 %v284, 0.03125
    %v321 = vmul.f32 %v286, 0.03125
    %v322 = vmul.f32 %v288, 0.03125
    %v323 = vmul.f32 %v290, 0.03125
    %v324 = vmul.f32 %v292, 0.03125
    %v325 = vmul.f32 %v293, %v293
    %v326 = vmul.f32 %v294, %v294
    %v327 = vmul.f32 %v295, %v295
    %v328 = vmul.f32 %v296, %v296
    %v329 = vmul.f32 %v297, %v297
    %v330 = vmul.f32 %v298, %v298
    %v331 = vmul.f32 %v299, %v299
    %v332 = vmul.f32 %v300, %v300
    %v333 = vmul.f32 %v301, %v301
    %v334 = vmul.f32 %v302, %v302
    %v335 = vmul.f32 %v303, %v303
    %v336 = vmul.f32 %v304, %v304
    %v337 = vmul.f32 %v305, %v305
    %v338 = vmul.f32 %v306, %v306
    %v339 = vmul.f32 %v307, %v307
    %v340 = vmul.f32 %v308, %v308
    %v341 = vsub.f32 %v309, %v325
    %v342 = vsub.f32 %v310, %v326
    %v343 = vsub.f32 %v311, %v327
    %v344 = vsub.f32 %v312, %v328
    %v345 = vsub.f32 %v313, %v329
    %v346 = vsub.f32 %v314, %v330
    %v347 = vsub.f32 %v315, %v331
    %v348 = vsub.f32 %v316, %v332
    %v349 = vsub.f32 %v317, %v333
    %v350 = vsub.f32 %v318, %v334
    %v351 = vsub.f32 %v319, %v335
    %v352 = vsub.f32 %v320, %v336
    %v353 = vsub.f32 %v321, %v337
    %v354 = vsub.f32 %v322, %v338
    %v355 = vsub.f32 %v323, %v339
    %v356 = vsub.f32 %v324, %v340
    %v357 = vmax.f32 %v341, 0.0
    %v358 = vmax.f32 %v342, 0.0
    %v359 = vmax.f32 %v343, 0.0
    %v360 = vmax.f32 %v344, 0.0
    %v361 = vmax.f32 %v345, 0.0
    %v362 = vmax.f32 %v346, 0.0
    %v363 = vmax.f32 %v347, 0.0
    %v364 = vmax.f32 %v348, 0.0
    %v365 = vmax.f32 %v349, 0.0
    %v366 = vmax.f32 %v350, 0.0
    %v367 = vmax.f32 %v351, 0.0
    %v368 = vmax.f32 %v352, 0.0
    %v369 = vmax.f32 %v353, 0.0
    %v370 = vmax.f32 %v354, 0.0
    %v371 = vmax.f32 %v355, 0.0
    %v372 = vmax.f32 %v356, 0.0
    %v373 = vadd.f32 %v357, 1e-05
    %v374 = vadd.f32 %v358, 1e-05
    %v375 = vadd.f32 %v359, 1e-05
    %v376 = vadd.f32 %v360, 1e-05
    %v377 = vadd.f32 %v361, 1e-05
    %v378 = vadd.f32 %v362, 1e-05
    %v379 = vadd.f32 %v363, 1e-05
    %v380 = vadd.f32 %v364, 1e-05
    %v381 = vadd.f32 %v365, 1e-05
    %v382 = vadd.f32 %v366, 1e-05
    %v383 = vadd.f32 %v367, 1e-05
    %v384 = vadd.f32 %v368, 1e-05
    %v385 = vadd.f32 %v369, 1e-05
    %v386 = vadd.f32 %v370, 1e-05
    %v387 = vadd.f32 %v371, 1e-05
    %v388 = vadd.f32 %v372, 1e-05
    %v389 = vrsqrt.pop %v373
    %v390 = vrsqrt.pop %v374
    %v391 = vrsqrt.pop %v375
    %v392 = vrsqrt.pop %v376
    %v393 = vrsqrt.pop %v377
    %v394 = vrsqrt.pop %v378
    %v395 = vrsqrt.pop %v379
    %v396 = vrsqrt.pop %v380
    %v397 = vrsqrt.pop %v381
    %v398 = vrsqrt.pop %v382
    %v399 = vrsqrt.pop %v383
    %v400 = vrsqrt.pop %v384
    %v401 = vrsqrt.pop %v385
    %v402 = vrsqrt.pop %v386
    %v403 = vrsqrt.pop %v387
    %v404 = vrsqrt.pop %v388
    %v405 = vsub.f32 %v197, %v293
    %v406 = vsub.f32 %v198, %v294
    %v407 = vsub.f32 %v199, %v295
    %v408 = vsub.f32 %v200, %v296
    %v409 = vsub.f32 %v201, %v297
    %v410 = vsub.f32 %v202, %v298
    %v411 = vsub.f32 %v203, %v299
    %v412 = vsub.f32 %v204, %v300
    %v413 = vsub.f32 %v205, %v301
    %v414 = vsub.f32 %v206, %v302
    %v415 = vsub.f32 %v207, %v303
    %v416 = vsub.f32 %v208, %v304
    %v417 = vsub.f32 %v209, %v305
    %v418 = vsub.f32 %v210, %v306
    %v419 = vsub.f32 %v211, %v307
    %v420 = vsub.f32 %v212, %v308
    %v421 = vmul.f32 %v405, %v389
    %v422 = vmul.f32 %v406, %v390
    %v423 = vmul.f32 %v407, %v391
    %v424 = vmul.f32 %v408, %v392
    %v425 = vmul.f32 %v409, %v393
    %v426 = vmul.f32 %v410, %v394
    %v427 = vmul.f32 %v411, %v395
    %v428 = vmul.f32 %v412, %v396
    %v429 = vmul.f32 %v413, %v397
    %v430 = vmul.f32 %v414, %v398
    %v431 = vmul.f32 %v415, %v399
    %v432 = vmul.f32 %v416, %v400
    %v433 = vmul.f32 %v417, %v401
    %v434 = vmul.f32 %v418, %v402
    %v435 = vmul.f32 %v419, %v403
    %v436 = vmul.f32 %v420, %v404
    %v437 = vpack.c.bf16 %v422, %v421
    %v438 = vpack.c.bf16 %v424, %v423
    %v439 = vpack.c.bf16 %v426, %v425
    %v440 = vpack.c.bf16 %v428, %v427
    %v441 = vpack.c.bf16 %v430, %v429
    %v442 = vpack.c.bf16 %v432, %v431
    %v443 = vpack.c.bf16 %v434, %v433
    %v444 = vpack.c.bf16 %v436, %v435
    %v445 = vld [vmem:[%s3] sm:$0xf]
    %v446 = vld [vmem:[%s3 + $0x4] sm:$0xf]
    %v447 = vld [vmem:[%s3 + $0x8] sm:$0xf]
    %v448 = vld [vmem:[%s3 + $0xc] sm:$0xf]
    %v449 = vld [vmem:[%s3 + $0x10] sm:$0xf]
    %v450 = vld [vmem:[%s3 + $0x14] sm:$0xf]
    %v451 = vld [vmem:[%s3 + $0x18] sm:$0xf]
    %v452 = vld [vmem:[%s3 + $0x1c] sm:$0xf]
    %v453 = vld [vmem:[%s3 + $0x20] sm:$0xf]
    %v454 = vld [vmem:[%s3 + $0x24] sm:$0xf]
    %v455 = vld [vmem:[%s3 + $0x28] sm:$0xf]
    %v456 = vld [vmem:[%s3 + $0x2c] sm:$0xf]
    %v457 = vld [vmem:[%s3 + $0x30] sm:$0xf]
    %v458 = vld [vmem:[%s3 + $0x34] sm:$0xf]
    %v459 = vld [vmem:[%s3 + $0x38] sm:$0xf]
    %v460 = vld [vmem:[%s3 + $0x3c] sm:$0xf]
    %v461 = vld [vmem:[%s4] sm:$0x1]
    %v463 = vlaneseq
    %v464 = vshrl.u32 %v463, 7
    %v465 = vsub.s32 0, %v464
    %v466 = vrot.slane %v461, %v465
    %v484 = vunpack.c.l.b16 %v445
    %v485 = vunpack.c.l.b16 %v446
    %v486 = vunpack.c.l.b16 %v447
    %v487 = vunpack.c.l.b16 %v448
    %v488 = vunpack.c.l.b16 %v449
    %v489 = vunpack.c.l.b16 %v450
    %v490 = vunpack.c.l.b16 %v451
    %v491 = vunpack.c.l.b16 %v452
    %v492 = vunpack.c.l.b16 %v453
    %v493 = vunpack.c.l.b16 %v454
    %v494 = vunpack.c.l.b16 %v455
    %v495 = vunpack.c.l.b16 %v456
    %v496 = vunpack.c.l.b16 %v457
    %v497 = vunpack.c.l.b16 %v458
    %v498 = vunpack.c.l.b16 %v459
    %v499 = vunpack.c.l.b16 %v460
    %v500 = vpack.c.b16 %v485, %v484
    %v501 = vpack.c.b16 %v487, %v486
    %v502 = vpack.c.b16 %v489, %v488
    %v503 = vpack.c.b16 %v491, %v490
    %v504 = vpack.c.b16 %v493, %v492
    %v505 = vpack.c.b16 %v495, %v494
    %v506 = vpack.c.b16 %v497, %v496
    %v507 = vpack.c.b16 %v499, %v498
    %516 = vmatprep.subr.bf16.mxu0 0
    %517 = vmatpush1.bf16.msra.mxu0 %v500
    %518 = vmatprep.subr.bf16.mxu0 0
    %519 = vmatpush1.bf16.msra.mxu0 %v501
    %520 = vmatprep.subr.bf16.mxu0 0
    %521 = vmatpush1.bf16.msra.mxu0 %v502
    %522 = vmatprep.subr.bf16.mxu0 0
    %523 = vmatpush1.bf16.msra.mxu0 %v503
    %524 = vmatprep.subr.bf16.mxu0 0
    %525 = vmatpush1.bf16.msra.mxu0 %v504
    %526 = vmatprep.subr.bf16.mxu0 0
    %527 = vmatpush1.bf16.msra.mxu0 %v505
    %528 = vmatprep.subr.bf16.mxu0 0
    %529 = vmatpush1.bf16.msra.mxu0 %v506
    %530 = vmatprep.subr.bf16.mxu0 0
    %531 = vmatpush1.bf16.msra.mxu0 %v507
    %532 = vmatprep.subr.bf16.mxu0 0
    %533 = vmatpush1.bf16.msra.mxu0 0
    %534 = vmatprep.subr.bf16.mxu0 0
    %535 = vmatpush1.bf16.msra.mxu0 0
    %536 = vmatprep.subr.bf16.mxu0 0
    %537 = vmatpush1.bf16.msra.mxu0 0
    %538 = vmatprep.subr.bf16.mxu0 0
    %539 = vmatpush1.bf16.msra.mxu0 0
    %540 = vmatprep.subr.bf16.mxu0 0
    %541 = vmatpush1.bf16.msra.mxu0 0
    %542 = vmatprep.subr.bf16.mxu0 0
    %543 = vmatpush1.bf16.msra.mxu0 0
    %544 = vmatprep.subr.bf16.mxu0 0
    %545 = vmatpush1.bf16.msra.mxu0 0
    %546 = vmatprep.subr.bf16.mxu0 0
    %547 = vmatpush1.bf16.msra.mxu0 0
    %548 = vmatprep.mubr.bf16.mxu0 0
    %549 = vmatmul.mubr.bf16.gmra.mrb[0].mxu0 %v437
    %v550 = vpop.f32.mrb[0].mxu0
    %v551 = vadd.f32 %v466, %v550
    %v552 = vpop.f32.mrb[0].mxu0
    %v553 = vpop.f32.mrb[0].mxu0
    %v554 = vadd.f32 %v466, %v553
    %v555 = vpop.f32.mrb[0].mxu0
    %556 = vmatprep.mubr.bf16.mxu0 0
    %557 = vmatmul.mubr.bf16.gmra.mrb[0].mxu0 %v438
    %v558 = vpop.f32.mrb[0].mxu0
    %v559 = vadd.f32 %v466, %v558
    %v560 = vpop.f32.mrb[0].mxu0
    %v561 = vpop.f32.mrb[0].mxu0
    %v562 = vadd.f32 %v466, %v561
    %v563 = vpop.f32.mrb[0].mxu0
    %564 = vmatprep.mubr.bf16.mxu0 0
    %565 = vmatmul.mubr.bf16.gmra.mrb[0].mxu0 %v439
    %v566 = vpop.f32.mrb[0].mxu0
    %v567 = vadd.f32 %v466, %v566
    %v568 = vpop.f32.mrb[0].mxu0
    %v569 = vpop.f32.mrb[0].mxu0
    %v570 = vadd.f32 %v466, %v569
    %v571 = vpop.f32.mrb[0].mxu0
    %572 = vmatprep.mubr.bf16.mxu0 0
    %573 = vmatmul.mubr.bf16.gmra.mrb[0].mxu0 %v440
    %v574 = vpop.f32.mrb[0].mxu0
    %v575 = vadd.f32 %v466, %v574
    %v576 = vpop.f32.mrb[0].mxu0
    %v577 = vpop.f32.mrb[0].mxu0
    %v578 = vadd.f32 %v466, %v577
    %v579 = vpop.f32.mrb[0].mxu0
    %580 = vmatprep.mubr.bf16.mxu0 0
    %581 = vmatmul.mubr.bf16.gmra.mrb[0].mxu0 %v441
    %v582 = vpop.f32.mrb[0].mxu0
    %v583 = vadd.f32 %v466, %v582
    %v584 = vpop.f32.mrb[0].mxu0
    %v585 = vpop.f32.mrb[0].mxu0
    %v586 = vadd.f32 %v466, %v585
    %v587 = vpop.f32.mrb[0].mxu0
    %588 = vmatprep.mubr.bf16.mxu0 0
    %589 = vmatmul.mubr.bf16.gmra.mrb[0].mxu0 %v442
    %v590 = vpop.f32.mrb[0].mxu0
    %v591 = vadd.f32 %v466, %v590
    %v592 = vpop.f32.mrb[0].mxu0
    %v593 = vpop.f32.mrb[0].mxu0
    %v594 = vadd.f32 %v466, %v593
    %v595 = vpop.f32.mrb[0].mxu0
    %596 = vmatprep.mubr.bf16.mxu0 0
    %597 = vmatmul.mubr.bf16.gmra.mrb[0].mxu0 %v443
    %v598 = vpop.f32.mrb[0].mxu0
    %v599 = vadd.f32 %v466, %v598
    %v600 = vpop.f32.mrb[0].mxu0
    %v601 = vpop.f32.mrb[0].mxu0
    %v602 = vadd.f32 %v466, %v601
    %v603 = vpop.f32.mrb[0].mxu0
    %604 = vmatprep.mubr.bf16.mxu0 0
    %605 = vmatmul.mubr.bf16.gmra.mrb[0].mxu0 %v444
    %v606 = vpop.f32.mrb[0].mxu0
    %v607 = vadd.f32 %v466, %v606
    %v608 = vpop.f32.mrb[0].mxu0
    %v609 = vpop.f32.mrb[0].mxu0
    %v610 = vadd.f32 %v466, %v609
    %v611 = vpop.f32.mrb[0].mxu0
    %612 = vdwg.mxu0
    %v613 = vmax.f32 %v551, 0.0
    %v614 = vmax.f32 %v554, 0.0
    %v615 = vmax.f32 %v559, 0.0
    %v616 = vmax.f32 %v562, 0.0
    %v617 = vmax.f32 %v567, 0.0
    %v618 = vmax.f32 %v570, 0.0
    %v619 = vmax.f32 %v575, 0.0
    %v620 = vmax.f32 %v578, 0.0
    %v621 = vmax.f32 %v583, 0.0
    %v622 = vmax.f32 %v586, 0.0
    %v623 = vmax.f32 %v591, 0.0
    %v624 = vmax.f32 %v594, 0.0
    %v625 = vmax.f32 %v599, 0.0
    %v626 = vmax.f32 %v602, 0.0
    %v627 = vmax.f32 %v607, 0.0
    %v628 = vmax.f32 %v610, 0.0
    %629 = vadd.xlane.f32.xlu0 %v613
    %v630 = vpop.xlane.xlu0 %629
    %631 = vadd.xlane.f32.xlu0 %v614
    %v632 = vpop.xlane.xlu0 %631
    %633 = vadd.xlane.f32.xlu0 %v615
    %v634 = vpop.xlane.xlu0 %633
    %635 = vadd.xlane.f32.xlu0 %v616
    %v636 = vpop.xlane.xlu0 %635
    %637 = vadd.xlane.f32.xlu0 %v617
    %v638 = vpop.xlane.xlu0 %637
    %639 = vadd.xlane.f32.xlu0 %v618
    %v640 = vpop.xlane.xlu0 %639
    %641 = vadd.xlane.f32.xlu0 %v619
    %v642 = vpop.xlane.xlu0 %641
    %643 = vadd.xlane.f32.xlu0 %v620
    %v644 = vpop.xlane.xlu0 %643
    %645 = vadd.xlane.f32.xlu0 %v621
    %v646 = vpop.xlane.xlu0 %645
    %647 = vadd.xlane.f32.xlu0 %v622
    %v648 = vpop.xlane.xlu0 %647
    %649 = vadd.xlane.f32.xlu0 %v623
    %v650 = vpop.xlane.xlu0 %649
    %651 = vadd.xlane.f32.xlu0 %v624
    %v652 = vpop.xlane.xlu0 %651
    %653 = vadd.xlane.f32.xlu0 %v625
    %v654 = vpop.xlane.xlu0 %653
    %655 = vadd.xlane.f32.xlu0 %v626
    %v656 = vpop.xlane.xlu0 %655
    %657 = vadd.xlane.f32.xlu0 %v627
    %v658 = vpop.xlane.xlu0 %657
    %659 = vadd.xlane.f32.xlu0 %v628
    %v660 = vpop.xlane.xlu0 %659
    %v661 = vmul.f32 %v613, %v613
    %v662 = vmul.f32 %v614, %v614
    %v663 = vmul.f32 %v615, %v615
    %v664 = vmul.f32 %v616, %v616
    %v665 = vmul.f32 %v617, %v617
    %v666 = vmul.f32 %v618, %v618
    %v667 = vmul.f32 %v619, %v619
    %v668 = vmul.f32 %v620, %v620
    %v669 = vmul.f32 %v621, %v621
    %v670 = vmul.f32 %v622, %v622
    %v671 = vmul.f32 %v623, %v623
    %v672 = vmul.f32 %v624, %v624
    %v673 = vmul.f32 %v625, %v625
    %v674 = vmul.f32 %v626, %v626
    %v675 = vmul.f32 %v627, %v627
    %v676 = vmul.f32 %v628, %v628
    %677 = vadd.xlane.f32.xlu0 %v661
    %v678 = vpop.xlane.xlu0 %677
    %679 = vadd.xlane.f32.xlu0 %v662
    %v680 = vpop.xlane.xlu0 %679
    %681 = vadd.xlane.f32.xlu0 %v663
    %v682 = vpop.xlane.xlu0 %681
    %683 = vadd.xlane.f32.xlu0 %v664
    %v684 = vpop.xlane.xlu0 %683
    %685 = vadd.xlane.f32.xlu0 %v665
    %v686 = vpop.xlane.xlu0 %685
    %687 = vadd.xlane.f32.xlu0 %v666
    %v688 = vpop.xlane.xlu0 %687
    %689 = vadd.xlane.f32.xlu0 %v667
    %v690 = vpop.xlane.xlu0 %689
    %691 = vadd.xlane.f32.xlu0 %v668
    %v692 = vpop.xlane.xlu0 %691
    %693 = vadd.xlane.f32.xlu0 %v669
    %v694 = vpop.xlane.xlu0 %693
    %695 = vadd.xlane.f32.xlu0 %v670
    %v696 = vpop.xlane.xlu0 %695
    %697 = vadd.xlane.f32.xlu0 %v671
    %v698 = vpop.xlane.xlu0 %697
    %699 = vadd.xlane.f32.xlu0 %v672
    %v700 = vpop.xlane.xlu0 %699
    %701 = vadd.xlane.f32.xlu0 %v673
    %v702 = vpop.xlane.xlu0 %701
    %703 = vadd.xlane.f32.xlu0 %v674
    %v704 = vpop.xlane.xlu0 %703
    %705 = vadd.xlane.f32.xlu0 %v675
    %v706 = vpop.xlane.xlu0 %705
    %707 = vadd.xlane.f32.xlu0 %v676
    %v708 = vpop.xlane.xlu0 %707
    %v709 = vmul.f32 %v630, 0.03125
    %v710 = vmul.f32 %v632, 0.03125
    %v711 = vmul.f32 %v634, 0.03125
    %v712 = vmul.f32 %v636, 0.03125
    %v713 = vmul.f32 %v638, 0.03125
    %v714 = vmul.f32 %v640, 0.03125
    %v715 = vmul.f32 %v642, 0.03125
    %v716 = vmul.f32 %v644, 0.03125
    %v717 = vmul.f32 %v646, 0.03125
    %v718 = vmul.f32 %v648, 0.03125
    %v719 = vmul.f32 %v650, 0.03125
    %v720 = vmul.f32 %v652, 0.03125
    %v721 = vmul.f32 %v654, 0.03125
    %v722 = vmul.f32 %v656, 0.03125
    %v723 = vmul.f32 %v658, 0.03125
    %v724 = vmul.f32 %v660, 0.03125
    %v725 = vmul.f32 %v678, 0.03125
    %v726 = vmul.f32 %v680, 0.03125
    %v727 = vmul.f32 %v682, 0.03125
    %v728 = vmul.f32 %v684, 0.03125
    %v729 = vmul.f32 %v686, 0.03125
    %v730 = vmul.f32 %v688, 0.03125
    %v731 = vmul.f32 %v690, 0.03125
    %v732 = vmul.f32 %v692, 0.03125
    %v733 = vmul.f32 %v694, 0.03125
    %v734 = vmul.f32 %v696, 0.03125
    %v735 = vmul.f32 %v698, 0.03125
    %v736 = vmul.f32 %v700, 0.03125
    %v737 = vmul.f32 %v702, 0.03125
    %v738 = vmul.f32 %v704, 0.03125
    %v739 = vmul.f32 %v706, 0.03125
    %v740 = vmul.f32 %v708, 0.03125
    %v741 = vmul.f32 %v709, %v709
    %v742 = vmul.f32 %v710, %v710
    %v743 = vmul.f32 %v711, %v711
    %v744 = vmul.f32 %v712, %v712
    %v745 = vmul.f32 %v713, %v713
    %v746 = vmul.f32 %v714, %v714
    %v747 = vmul.f32 %v715, %v715
    %v748 = vmul.f32 %v716, %v716
    %v749 = vmul.f32 %v717, %v717
    %v750 = vmul.f32 %v718, %v718
    %v751 = vmul.f32 %v719, %v719
    %v752 = vmul.f32 %v720, %v720
    %v753 = vmul.f32 %v721, %v721
    %v754 = vmul.f32 %v722, %v722
    %v755 = vmul.f32 %v723, %v723
    %v756 = vmul.f32 %v724, %v724
    %v757 = vsub.f32 %v725, %v741
    %v758 = vsub.f32 %v726, %v742
    %v759 = vsub.f32 %v727, %v743
    %v760 = vsub.f32 %v728, %v744
    %v761 = vsub.f32 %v729, %v745
    %v762 = vsub.f32 %v730, %v746
    %v763 = vsub.f32 %v731, %v747
    %v764 = vsub.f32 %v732, %v748
    %v765 = vsub.f32 %v733, %v749
    %v766 = vsub.f32 %v734, %v750
    %v767 = vsub.f32 %v735, %v751
    %v768 = vsub.f32 %v736, %v752
    %v769 = vsub.f32 %v737, %v753
    %v770 = vsub.f32 %v738, %v754
    %v771 = vsub.f32 %v739, %v755
    %v772 = vsub.f32 %v740, %v756
    %v773 = vmax.f32 %v757, 0.0
    %v774 = vmax.f32 %v758, 0.0
    %v775 = vmax.f32 %v759, 0.0
    %v776 = vmax.f32 %v760, 0.0
    %v777 = vmax.f32 %v761, 0.0
    %v778 = vmax.f32 %v762, 0.0
    %v779 = vmax.f32 %v763, 0.0
    %v780 = vmax.f32 %v764, 0.0
    %v781 = vmax.f32 %v765, 0.0
    %v782 = vmax.f32 %v766, 0.0
    %v783 = vmax.f32 %v767, 0.0
    %v784 = vmax.f32 %v768, 0.0
    %v785 = vmax.f32 %v769, 0.0
    %v786 = vmax.f32 %v770, 0.0
    %v787 = vmax.f32 %v771, 0.0
    %v788 = vmax.f32 %v772, 0.0
    %v789 = vadd.f32 %v773, 1e-05
    %v790 = vadd.f32 %v774, 1e-05
    %v791 = vadd.f32 %v775, 1e-05
    %v792 = vadd.f32 %v776, 1e-05
    %v793 = vadd.f32 %v777, 1e-05
    %v794 = vadd.f32 %v778, 1e-05
    %v795 = vadd.f32 %v779, 1e-05
    %v796 = vadd.f32 %v780, 1e-05
    %v797 = vadd.f32 %v781, 1e-05
    %v798 = vadd.f32 %v782, 1e-05
    %v799 = vadd.f32 %v783, 1e-05
    %v800 = vadd.f32 %v784, 1e-05
    %v801 = vadd.f32 %v785, 1e-05
    %v802 = vadd.f32 %v786, 1e-05
    %v803 = vadd.f32 %v787, 1e-05
    %v804 = vadd.f32 %v788, 1e-05
    %v805 = vrsqrt.pop %v789
    %v806 = vrsqrt.pop %v790
    %v807 = vrsqrt.pop %v791
    %v808 = vrsqrt.pop %v792
    %v809 = vrsqrt.pop %v793
    %v810 = vrsqrt.pop %v794
    %v811 = vrsqrt.pop %v795
    %v812 = vrsqrt.pop %v796
    %v813 = vrsqrt.pop %v797
    %v814 = vrsqrt.pop %v798
    %v815 = vrsqrt.pop %v799
    %v816 = vrsqrt.pop %v800
    %v817 = vrsqrt.pop %v801
    %v818 = vrsqrt.pop %v802
    %v819 = vrsqrt.pop %v803
    %v820 = vrsqrt.pop %v804
    %v821 = vsub.f32 %v613, %v709
    %v822 = vsub.f32 %v614, %v710
    %v823 = vsub.f32 %v615, %v711
    %v824 = vsub.f32 %v616, %v712
    %v825 = vsub.f32 %v617, %v713
    %v826 = vsub.f32 %v618, %v714
    %v827 = vsub.f32 %v619, %v715
    %v828 = vsub.f32 %v620, %v716
    %v829 = vsub.f32 %v621, %v717
    %v830 = vsub.f32 %v622, %v718
    %v831 = vsub.f32 %v623, %v719
    %v832 = vsub.f32 %v624, %v720
    %v833 = vsub.f32 %v625, %v721
    %v834 = vsub.f32 %v626, %v722
    %v835 = vsub.f32 %v627, %v723
    %v836 = vsub.f32 %v628, %v724
    %v837 = vmul.f32 %v821, %v805
    %v838 = vmul.f32 %v822, %v806
    %v839 = vmul.f32 %v823, %v807
    %v840 = vmul.f32 %v824, %v808
    %v841 = vmul.f32 %v825, %v809
    %v842 = vmul.f32 %v826, %v810
    %v843 = vmul.f32 %v827, %v811
    %v844 = vmul.f32 %v828, %v812
    %v845 = vmul.f32 %v829, %v813
    %v846 = vmul.f32 %v830, %v814
    %v847 = vmul.f32 %v831, %v815
    %v848 = vmul.f32 %v832, %v816
    %v849 = vmul.f32 %v833, %v817
    %v850 = vmul.f32 %v834, %v818
    %v851 = vmul.f32 %v835, %v819
    %v852 = vmul.f32 %v836, %v820
    %v853 = vpack.c.bf16 %v838, %v837
    %v854 = vpack.c.bf16 %v840, %v839
    %v855 = vpack.c.bf16 %v842, %v841
    %v856 = vpack.c.bf16 %v844, %v843
    %v857 = vpack.c.bf16 %v846, %v845
    %v858 = vpack.c.bf16 %v848, %v847
    %v859 = vpack.c.bf16 %v850, %v849
    %v860 = vpack.c.bf16 %v852, %v851
    %v861 = vld [vmem:[%s5] sm:$0xf]
    %v862 = vld [vmem:[%s6] sm:$0xff]
    %864 = vset.pattern.permute.xlu0 0
    %865 = vperm.xlu0 %864, %v862
    %v866 = vpop.permute.xlu0 %865
    %868 = vmatprep.subr.bf16.mxu0 0
    %869 = vmatpush1.bf16.xpose.msra.mxu0 %v853
    %870 = vmatprep.subr.bf16.mxu0 0
    %871 = vmatpush1.bf16.xpose.msra.mxu0 %v854
    %872 = vmatprep.subr.bf16.mxu0 0
    %873 = vmatpush1.bf16.xpose.msra.mxu0 %v855
    %874 = vmatprep.subr.bf16.mxu0 0
    %875 = vmatpush1.bf16.xpose.msra.mxu0 %v856
    %876 = vmatprep.subr.bf16.mxu0 0
    %877 = vmatpush1.bf16.xpose.msra.mxu0 %v857
    %878 = vmatprep.subr.bf16.mxu0 0
    %879 = vmatpush1.bf16.xpose.msra.mxu0 %v858
    %880 = vmatprep.subr.bf16.mxu0 0
    %881 = vmatpush1.bf16.xpose.msra.mxu0 %v859
    %882 = vmatprep.subr.bf16.mxu0 0
    %883 = vmatpush1.bf16.xpose.msra.mxu0 %v860
    %884 = vmatprep.subr.bf16.mxu0 0
    %885 = vmatpush1.bf16.xpose.msra.mxu0 0
    %886 = vmatprep.subr.bf16.mxu0 0
    %887 = vmatpush1.bf16.xpose.msra.mxu0 0
    %888 = vmatprep.subr.bf16.mxu0 0
    %889 = vmatpush1.bf16.xpose.msra.mxu0 0
    %890 = vmatprep.subr.bf16.mxu0 0
    %891 = vmatpush1.bf16.xpose.msra.mxu0 0
    %892 = vmatprep.subr.bf16.mxu0 0
    %893 = vmatpush1.bf16.xpose.msra.mxu0 0
    %894 = vmatprep.subr.bf16.mxu0 0
    %895 = vmatpush1.bf16.xpose.msra.mxu0 0
    %896 = vmatprep.subr.bf16.mxu0 0
    %897 = vmatpush1.bf16.xpose.msra.mxu0 0
    %898 = vmatprep.subr.bf16.mxu0 0
    %899 = vmatpush1.bf16.xpose.msra.mxu0 0
    %900 = vmatprep.mubr.bf16.mxu0 0
    %901 = vmatmul.mubr.bf16.gmra.mrb[0].mxu0 %v861
    %v902 = vpop.f32.mrb[0].mxu0
    %v903 = vadd.f32 %v866, %v902
    %v904 = vpop.f32.mrb[0].mxu0
    %v905 = vpop.f32.mrb[0].mxu0
    %v906 = vpop.f32.mrb[0].mxu0
    %907 = vdwg.mxu0
    %908 = vst [vmem:[#allocation2] sm:$0xff] %v903
    // Predicated region
    $region30: #{tpu_custom_call.1} parent=1 // pred_check
      _
    $region31: #{tpu_custom_call.1} parent=1 // pred_check_branch
      %910 = sbr.rel (0) target = $region33
    $region32: #{tpu_custom_call.1} parent=1 // pred_region
      %s912 = ssub.s32 128, 128
      %913 = vsyncadd [#allocation3], %s912
      %s915 = sshll.u32 [#allocation2], 4
      %s916 = int_to_ptr.vmem [resolvable:$true] %s915
      %918 = dma.vmem_to_hbm [thread:$0]  %s916, 128, %s7, [#allocation3]
    $region33: #{tpu_custom_call.1} parent=1 // pred_fallthru
      _
    // Predicated region
    $region34: #{tpu_custom_call.1} parent=1 // pred_check
      _
    $region35: #{tpu_custom_call.1} parent=1 // pred_check_branch
      %920 = sbr.rel (0) target = $region37
    $region36: #{tpu_custom_call.1} parent=1 // pred_region
      %921 = dma.done [#allocation3], 128
    $region37: #{tpu_custom_call.1} parent=1 // pred_fallthru
      _
    %922 = vsyncpa [#allocation3], 1

</llo_original>
